<compile_context>
chip_gen: v7x
topology: tpu7x:2x2x1
jax: 0.10.0
libtpu: 0.0.40
codegen_flags: <defaults>
</compile_context>

<pallas_src>
import functools

import jax
import jax.numpy as jnp
from jax import lax
from jax.experimental import pallas as pl
from jax.experimental.pallas import tpu as pltpu


_COMPUTE_DTYPE = jnp.bfloat16      # MXU operand dtype (f32 accumulation)
_LANE = 128                        # TPU lane width (last-dim alignment)


# --------------------------- hardware-aware planning ---------------------------


@functools.lru_cache(maxsize=None)
def _vmem_budget_bytes():
    """Generation-aware VMEM budget (128 MiB on v5e/v6e, 64 MiB on v7x)."""
    cap = 128 * 1024 * 1024
    try:
        cap = int(pltpu.get_tpu_info().vmem_capacity_bytes)
    except Exception:
        pass
    cap = max(32 * 1024 * 1024, min(cap, 128 * 1024 * 1024))
    return (cap * 3) // 4          # leave headroom for compiler scratch


def _round_up(x, m):
    return ((x + m - 1) // m) * m


def _pick_tile(hw_pad, cap):
    """Largest multiple of 128 that divides hw_pad and is <= cap (>= 128)."""
    t = min(hw_pad, max(_LANE, (cap // _LANE) * _LANE))
    while hw_pad % t:
        t -= _LANE
    return t


# -------------------------------- Pallas kernels --------------------------------


def _fused_kernel(g_ref, x_ref, wg_ref, wx_ref, b_ref, w1_ref, w2_ref,
                  wp_ref, bp_ref, out_ref, psi_cache, sum_sc,
                  *, tile, n_tiles, hw, inv_hw, mask_pad):
    """Fused: psi + channel sums per tile; SE scale + gate sweep at last tile."""
    t = pl.program_id(1)
    start = pl.multiple_of(t * tile, _LANE)

    @pl.when(t == 0)
    def _():
        sum_sc[...] = jnp.zeros_like(sum_sc)

    g = g_ref[0].astype(_COMPUTE_DTYPE)                  # (F_g, T)
    x_raw = x_ref[0]                                     # (F_l, T) caller dtype
    x = x_raw.astype(_COMPUTE_DTYPE)

    pre = (jnp.dot(wg_ref[...], g, preferred_element_type=jnp.float32)
           + jnp.dot(wx_ref[...], x, preferred_element_type=jnp.float32)
           + b_ref[...])                                 # (F_int, T) f32
    psi = jnp.maximum(pre, 0.0)

    if mask_pad:  # static: only when HW is not a multiple of 128
        col = t * tile + lax.broadcasted_iota(jnp.int32, psi.shape, 1)
        psi = jnp.where(col < hw, psi, 0.0)

    psi_cache[:, pl.ds(start, tile)] = psi               # cache for 2nd sweep
    out_ref[0, :, pl.ds(start, tile)] = x_raw.astype(out_ref.dtype)
    sum_sc[...] += jnp.sum(psi, axis=1, keepdims=True)   # (F_int, 1)

    @pl.when(t == n_tiles - 1)
    def _finalize():
        mean = sum_sc[...] * inv_hw                                    # (F_int,1)
        h = jnp.maximum(
            jnp.dot(w1_ref[...], mean, preferred_element_type=jnp.float32), 0.0)
        s = jax.nn.sigmoid(
            jnp.dot(w2_ref[...], h, preferred_element_type=jnp.float32))
        # SE scale folded into the psi head: wp.(s*psi) == (s*wp).psi
        sw = s * wp_ref[...]                                           # (F_int,1)

        @pl.loop(0, n_tiles)
        def _(i):
            st = pl.multiple_of(i * tile, _LANE)
            psi_t = psi_cache[:, pl.ds(st, tile)]                      # (F_int,T)
            p_t = jax.nn.sigmoid(
                jnp.sum(psi_t * sw, axis=0, keepdims=True) + bp_ref[...])
            xt = out_ref[0, :, pl.ds(st, tile)].astype(jnp.float32)
            out_ref[0, :, pl.ds(st, tile)] = (xt * p_t).astype(out_ref.dtype)


def _sum_kernel(g_ref, x_ref, wg_ref, wx_ref, b_ref, sum_ref,
                *, tile, hw, mask_pad):
    """Fallback pass 1: per-channel spatial sums of psi = relu(Wg g + Wx x + b)."""
    t = pl.program_id(1)

    @pl.when(t == 0)
    def _():
        sum_ref[...] = jnp.zeros_like(sum_ref)

    g = g_ref[0].astype(_COMPUTE_DTYPE)
    x = x_ref[0].astype(_COMPUTE_DTYPE)
    pre = (jnp.dot(wg_ref[...], g, preferred_element_type=jnp.float32)
           + jnp.dot(wx_ref[...], x, preferred_element_type=jnp.float32)
           + b_ref[...])
    psi = jnp.maximum(pre, 0.0)

    if mask_pad:
        col = t * tile + lax.broadcasted_iota(jnp.int32, psi.shape, 1)
        psi = jnp.where(col < hw, psi, 0.0)

    sum_ref[...] += jnp.sum(psi, axis=1, keepdims=True)[None]   # (1, F_int, 1)


def _gate_kernel(g_ref, x_ref, sw_ref, wg_ref, wx_ref, b_ref, bp_ref, out_ref):
    """Fallback pass 2: recompute psi, apply SE-scaled psi head and gate x."""
    g = g_ref[0].astype(_COMPUTE_DTYPE)
    x_raw = x_ref[0]
    x = x_raw.astype(_COMPUTE_DTYPE)
    pre = (jnp.dot(wg_ref[...], g, preferred_element_type=jnp.float32)
           + jnp.dot(wx_ref[...], x, preferred_element_type=jnp.float32)
           + b_ref[...])
    psi = jnp.maximum(pre, 0.0)
    p = jax.nn.sigmoid(
        jnp.sum(psi * sw_ref[0], axis=0, keepdims=True) + bp_ref[...])
    out_ref[0] = (x_raw.astype(jnp.float32) * p).astype(out_ref.dtype)


# ----------------------------------- Wrapper ------------------------------------


def _fold_bn(w, b, gamma, beta, mean, var, eps=1e-5):
    """Fold inference-mode BatchNorm into a 1x1 conv.  w: (Cout, Cin)."""
    scale = gamma / jnp.sqrt(var + eps)
    return w * scale[:, None], (b - mean) * scale + beta


@functools.partial(jax.jit, static_argnames=("force_two_pass",))
def attention_block_se(g, x, params, *, force_two_pass=False):
    """g: (B, F_g, H, W), x: (B, F_l, H, W)  ->  (B, F_l, H, W)."""
    B, F_g, H, W = g.shape
    _, F_l, _, _ = x.shape
    HW = H * W
    HW_pad = _round_up(HW, _LANE)
    mask_pad = HW_pad != HW

    wg, bg = _fold_bn(params["wg"], params["bg"], params["bn_g_gamma"],
                      params["bn_g_beta"], params["bn_g_mean"], params["bn_g_var"])
    wx, bx = _fold_bn(params["wx"], params["bx"], params["bn_x_gamma"],
                      params["bn_x_beta"], params["bn_x_mean"], params["bn_x_var"])
    wp, bp = _fold_bn(params["wp"], params["bp"], params["bn_p_gamma"],
                      params["bn_p_beta"], params["bn_p_mean"], params["bn_p_var"])

    F_int = wg.shape[0]
    hidden = params["se_w1"].shape[0]

    f32 = jnp.float32
    cd = _COMPUTE_DTYPE
    out_dtype = x.dtype
    in_bytes = jnp.dtype(g.dtype).itemsize
    out_bytes = jnp.dtype(out_dtype).itemsize

    # NCHW -> (B, C, HW) is a free reshape; keep caller dtype (bf16 cast is
    # done in-kernel, riding free VPU slack).  Pad HW to a lane multiple.
    g_m = g.reshape(B, F_g, HW)
    x_m = x.reshape(B, F_l, HW)
    if mask_pad:
        pad = HW_pad - HW
        g_m = jnp.pad(g_m, ((0, 0), (0, 0), (0, pad)))
        x_m = jnp.pad(x_m, ((0, 0), (0, 0), (0, pad)))

    wg_c = wg.astype(cd)                              # (F_int, F_g)
    wx_c = wx.astype(cd)                              # (F_int, F_l)
    b_gx = (bg + bx).reshape(F_int, 1).astype(f32)    # combined W_g/W_x bias
    wp_col = wp.reshape(F_int, 1).astype(f32)
    bp2 = bp.reshape(1, 1).astype(f32)
    w1 = params["se_w1"].astype(f32)                  # (hidden, F_int)
    w2 = params["se_w2"].astype(f32)                  # (F_int, hidden)

    budget = _vmem_budget_bytes()
    const = lambda shape: pl.BlockSpec(shape, lambda b, t: (0,) * len(shape))

    conv_flops = 4 * B * HW_pad * F_int * (F_g + F_l)
    head_flops = 2 * B * HW_pad * (F_int + F_l)
    in_hbm = B * (F_g + F_l) * HW_pad * in_bytes
    out_hbm = B * F_l * HW_pad * out_bytes

    # Fused plan: psi cache + double-buffered resident output must fit VMEM.
    fixed = F_int * HW_pad * 4 + 2 * F_l * HW_pad * out_bytes
    use_fused = (not force_two_pass) and (fixed <= budget // 2)

    if use_fused:
        rem = budget - fixed
        per_col = 2 * (F_g + F_l) * in_bytes + 8 * F_int * 4 + 2 * F_l * out_bytes
        T = _pick_tile(HW_pad, max(_LANE, rem // max(per_col, 1)))
        n_t = HW_pad // T

        out = pl.pallas_call(
            functools.partial(_fused_kernel, tile=T, n_tiles=n_t, hw=HW,
                              inv_hw=1.0 / float(HW), mask_pad=mask_pad),
            out_shape=jax.ShapeDtypeStruct((B, F_l, HW_pad), out_dtype),
            grid_spec=pltpu.PrefetchScalarGridSpec(
                num_scalar_prefetch=0,
                grid=(B, n_t),
                in_specs=[
                    pl.BlockSpec((1, F_g, T), lambda b, t: (b, 0, t)),
                    pl.BlockSpec((1, F_l, T), lambda b, t: (b, 0, t)),
                    const((F_int, F_g)),
                    const((F_int, F_l)),
                    const((F_int, 1)),
                    const((hidden, F_int)),
                    const((F_int, hidden)),
                    const((F_int, 1)),
                    const((1, 1)),
                ],
                out_specs=pl.BlockSpec((1, F_l, HW_pad), lambda b, t: (b, 0, 0)),
                scratch_shapes=[pltpu.VMEM((F_int, HW_pad), f32),
                                pltpu.VMEM((F_int, 1), f32)],
            ),
            compiler_params=pltpu.CompilerParams(
                dimension_semantics=("parallel", "arbitrary"),
                vmem_limit_bytes=budget),
            cost_estimate=pl.CostEstimate(
                flops=int(conv_flops + head_flops),
                transcendentals=int(B * (HW_pad + F_int)),
                bytes_accessed=int(in_hbm + out_hbm)),
        )(g_m, x_m, wg_c, wx_c, b_gx, w1, w2, wp_col, bp2)
    else:
        # ---- Two-pass fallback (psi slab too large for VMEM residency) ----
        per_col = 2 * (F_g + F_l) * in_bytes + 6 * F_int * 4 + 2 * F_l * out_bytes
        T = _pick_tile(HW_pad, max(_LANE, (budget // 2) // max(per_col, 1)))
        n_t = HW_pad // T

        sums = pl.pallas_call(
            functools.partial(_sum_kernel, tile=T, hw=HW, mask_pad=mask_pad),
            out_shape=jax.ShapeDtypeStruct((B, F_int, 1), f32),
            grid_spec=pltpu.PrefetchScalarGridSpec(
                num_scalar_prefetch=0,
                grid=(B, n_t),
                in_specs=[
                    pl.BlockSpec((1, F_g, T), lambda b, t: (b, 0, t)),
                    pl.BlockSpec((1, F_l, T), lambda b, t: (b, 0, t)),
                    const((F_int, F_g)),
                    const((F_int, F_l)),
                    const((F_int, 1)),
                ],
                out_specs=pl.BlockSpec((1, F_int, 1), lambda b, t: (b, 0, 0)),
            ),
            compiler_params=pltpu.CompilerParams(
                dimension_semantics=("parallel", "arbitrary"),
                vmem_limit_bytes=budget),
            cost_estimate=pl.CostEstimate(
                flops=int(conv_flops), transcendentals=0,
                bytes_accessed=int(in_hbm)),
        )(g_m, x_m, wg_c, wx_c, b_gx)

        # Tiny SE MLP in plain JAX; fold the SE scale into the psi-head weight.
        mean = sums[..., 0] * (1.0 / float(HW))                 # (B, F_int)
        h = jnp.maximum(mean @ w1.T, 0.0)                       # (B, hidden)
        s = jax.nn.sigmoid(h @ w2.T)                            # (B, F_int)
        sw = (s * wp.reshape(1, F_int))[..., None].astype(f32)  # (B, F_int, 1)

        out = pl.pallas_call(
            _gate_kernel,
            out_shape=jax.ShapeDtypeStruct((B, F_l, HW_pad), out_dtype),
            grid_spec=pltpu.PrefetchScalarGridSpec(
                num_scalar_prefetch=0,
                grid=(B, n_t),
                in_specs=[
                    pl.BlockSpec((1, F_g, T), lambda b, t: (b, 0, t)),
                    pl.BlockSpec((1, F_l, T), lambda b, t: (b, 0, t)),
                    pl.BlockSpec((1, F_int, 1), lambda b, t: (b, 0, 0)),
                    const((F_int, F_g)),
                    const((F_int, F_l)),
                    const((F_int, 1)),
                    const((1, 1)),
                ],
                out_specs=pl.BlockSpec((1, F_l, T), lambda b, t: (b, 0, t)),
            ),
            compiler_params=pltpu.CompilerParams(
                dimension_semantics=("parallel", "parallel"),
                vmem_limit_bytes=budget),
            cost_estimate=pl.CostEstimate(
                flops=int(conv_flops + head_flops),
                transcendentals=int(B * HW_pad),
                bytes_accessed=int(in_hbm + out_hbm)),
        )(g_m, x_m, sw, wg_c, wx_c, b_gx, bp2)

    if mask_pad:
        out = out[:, :, :HW]
    return out.reshape(B, F_l, H, W)


# ------------------------------ Pure-JAX reference -------------------------------


def attention_block_se_ref(g, x, params):
    """Reference: bf16-quantized conv operands, f32 everywhere else."""
    B, F_g, H, W = g.shape
    _, F_l, _, _ = x.shape
    HW = H * W
    wg, bg = _fold_bn(params["wg"], params["bg"], params["bn_g_gamma"],
                      params["bn_g_beta"], params["bn_g_mean"], params["bn_g_var"])
    wx, bx = _fold_bn(params["wx"], params["bx"], params["bn_x_gamma"],
                      params["bn_x_beta"], params["bn_x_mean"], params["bn_x_var"])
    wp, bp = _fold_bn(params["wp"], params["bp"], params["bn_p_gamma"],
                      params["bn_p_beta"], params["bn_p_mean"], params["bn_p_var"])
    f32 = jnp.float32
    hp = jax.lax.Precision.HIGHEST
    q = lambda a: a.astype(_COMPUTE_DTYPE).astype(f32)   # matmul-operand quant

    g_m = g.reshape(B, F_g, HW).astype(f32)
    x_m = x.reshape(B, F_l, HW).astype(f32)
    pre = (jnp.einsum("oc,bct->bot", q(wg), q(g_m), precision=hp)
           + jnp.einsum("oc,bct->bot", q(wx), q(x_m), precision=hp)
           + (bg + bx).astype(f32)[None, :, None])
    psi = jnp.maximum(pre, 0.0)                                   # (B, F_int, HW)
    mean = jnp.mean(psi, axis=2)                                  # (B, F_int)
    h = jnp.maximum(mean @ params["se_w1"].astype(f32).T, 0.0)    # (B, hidden)
    s = jax.nn.sigmoid(h @ params["se_w2"].astype(f32).T)         # (B, F_int)
    psi_se = psi * s[:, :, None]
    p = jax.nn.sigmoid(
        jnp.einsum("oc,bct->bot", wp.astype(f32), psi_se, precision=hp)
        + bp.astype(f32)[None, :, None])                          # (B, 1, HW)
    out = x_m * p
    return out.reshape(B, F_l, H, W)


# ------------------------------------- Main ---------------------------------------


def _init_params(key, F_g, F_l, F_int):
    # Matches Attention_block_se.__init__ (weights in PyTorch (out, in) layout).
    r = 16
    if F_int <= 64:
        r = F_int // 8
    hidden = F_int // r
    ks = jax.random.split(key, 16)
    n = lambda k, shape, s=0.1: (s * jax.random.normal(k, shape)).astype(jnp.float32)
    return {
        "wg": n(ks[0], (F_int, F_g)),
        "bg": n(ks[1], (F_int,)),
        "wx": n(ks[2], (F_int, F_l)),
        "bx": n(ks[3], (F_int,)),
        "se_w1": n(ks[4], (hidden, F_int)),
        "se_w2": n(ks[5], (F_int, hidden)),
        "wp": n(ks[6], (1, F_int)),
        "bp": n(ks[7], (1,)),
        # BatchNorm params (inference mode / running stats).
        "bn_g_gamma": 1.0 + n(ks[8], (F_int,)),
        "bn_g_beta": n(ks[9], (F_int,)),
        "bn_g_mean": n(ks[10], (F_int,)),
        "bn_g_var": 0.5 + jnp.abs(n(ks[11], (F_int,), 0.5)),
        "bn_x_gamma": 1.0 + n(ks[12], (F_int,)),
        "bn_x_beta": n(ks[13], (F_int,)),
        "bn_x_mean": n(ks[14], (F_int,)),
        "bn_x_var": 0.5 + jnp.abs(n(ks[15], (F_int,), 0.5)),
        "bn_p_gamma": jnp.array([1.05], jnp.float32),
        "bn_p_beta": jnp.array([0.02], jnp.float32),
        "bn_p_mean": jnp.array([0.01], jnp.float32),
        "bn_p_var": jnp.array([0.9], jnp.float32),
    }


if __name__ == "__main__":
    B, F_g, F_l, F_int, H, W = 2, 8, 8, 32, 16, 16

    key = jax.random.PRNGKey(0)
    kg, kx, kp = jax.random.split(key, 3)
    g = jax.random.normal(kg, (B, F_g, H, W), dtype=jnp.float32)
    x = jax.random.normal(kx, (B, F_l, H, W), dtype=jnp.float32)
    params = _init_params(kp, F_g, F_l, F_int)

    ref = attention_block_se_ref(g, x, params)

    # Fused single-pass path.
    out = jax.block_until_ready(attention_block_se(g, x, params))
    assert out.shape == (B, F_l, H, W)
    assert jnp.allclose(out, ref, atol=5e-3, rtol=5e-3), (
        float(jnp.max(jnp.abs(out - ref))))

    # Two-pass fallback path (large-HW regime), exercised explicitly.
    out2 = jax.block_until_ready(
        attention_block_se(g, x, params, force_two_pass=True))
    assert jnp.allclose(out2, ref, atol=5e-3, rtol=5e-3), (
        float(jnp.max(jnp.abs(out2 - ref))))

    # Non-128-divisible spatial extent (exercises padding + in-kernel masking).
    H2 = W2 = 10
    g2 = jax.random.normal(kg, (1, F_g, H2, W2), dtype=jnp.float32)
    x2 = jax.random.normal(kx, (1, F_l, H2, W2), dtype=jnp.float32)
    ref2 = attention_block_se_ref(g2, x2, params)
    out3 = jax.block_until_ready(attention_block_se(g2, x2, params))
    assert jnp.allclose(out3, ref2, atol=5e-3, rtol=5e-3), (
        float(jnp.max(jnp.abs(out3 - ref2))))

    print("KERNEL_OK")
</pallas_src>

<mosaic_0001>
module attributes {stable_mosaic.version = 11 : i64} {
  func.func @_fused_kernel(%arg0: i32, %arg1: i32, %arg2: memref<1x8x256xf32, #tpu.memory_space<vmem>>, %arg3: memref<1x8x256xf32, #tpu.memory_space<vmem>>, %arg4: memref<32x8xbf16, #tpu.memory_space<vmem>>, %arg5: memref<32x8xbf16, #tpu.memory_space<vmem>>, %arg6: memref<32x1xf32, #tpu.memory_space<vmem>>, %arg7: memref<8x32xf32, #tpu.memory_space<vmem>>, %arg8: memref<32x8xf32, #tpu.memory_space<vmem>>, %arg9: memref<32x1xf32, #tpu.memory_space<vmem>>, %arg10: memref<1x1xf32, #tpu.memory_space<vmem>>, %arg11: memref<1x8x256xf32, #tpu.memory_space<vmem>>, %arg12: memref<32x256xf32, #tpu.memory_space<vmem>>, %arg13: memref<32x1xf32, #tpu.memory_space<vmem>>) attributes {dimension_semantics = [#tpu.dimension_semantics<parallel>, #tpu.dimension_semantics<arbitrary>], iteration_bounds = array<i64: 2, 1>, scalar_prefetch = 0 : i64, scratch_operands = 2 : i64, tpu.core_type = #tpu.core_type<tc>, window_params = [{transform_indices = @transform_0, window_bounds = array<i64: 1, 8, 256>}, {transform_indices = @transform_1, window_bounds = array<i64: 1, 8, 256>}, {pipeline_mode = #tpu.pipeline_mode<synchronous>, transform_indices = @transform_2, window_bounds = array<i64: 32, 8>}, {pipeline_mode = #tpu.pipeline_mode<synchronous>, transform_indices = @transform_3, window_bounds = array<i64: 32, 8>}, {pipeline_mode = #tpu.pipeline_mode<synchronous>, transform_indices = @transform_4, window_bounds = array<i64: 32, 1>}, {pipeline_mode = #tpu.pipeline_mode<synchronous>, transform_indices = @transform_5, window_bounds = array<i64: 8, 32>}, {pipeline_mode = #tpu.pipeline_mode<synchronous>, transform_indices = @transform_6, window_bounds = array<i64: 32, 8>}, {pipeline_mode = #tpu.pipeline_mode<synchronous>, transform_indices = @transform_7, window_bounds = array<i64: 32, 1>}, {pipeline_mode = #tpu.pipeline_mode<synchronous>, transform_indices = @transform_8, window_bounds = array<i64: 1, 1>}, {transform_indices = @transform_9, window_bounds = array<i64: 1, 8, 256>}]} {
    %c256_i32 = arith.constant 256 : i32
    %0 = arith.muli %arg1, %c256_i32 : i32
    %1 = tpu.assume_multiple %0, 128 : i32
    %c0_i32 = arith.constant 0 : i32
    %2 = arith.cmpi eq, %arg1, %c0_i32 : i32
    %3 = arith.extui %2 : i1 to i32
    %c0_i32_0 = arith.constant 0 : i32
    %4 = arith.cmpi ne, %3, %c0_i32_0 : i32
    scf.if %4 {
      %cst_24 = arith.constant 0.000000e+00 : f32
      %35 = vector.broadcast %cst_24 : f32 to vector<32x1xf32>
      %c0_25 = arith.constant 0 : index
      %c0_26 = arith.constant 0 : index
      %36 = vector.load %arg13[%c0_25, %c0_26] : memref<32x1xf32, #tpu.memory_space<vmem>>, vector<32x1xf32>
      tpu.vector_store %arg13[%c0_25, %c0_26], %35 {strides = array<i32>} : memref<32x1xf32, #tpu.memory_space<vmem>>, vector<32x1xf32>,
    } else {
    }
    %c0 = arith.constant 0 : index
    %c0_1 = arith.constant 0 : index
    %c0_2 = arith.constant 0 : index
    %5 = vector.load %arg2[%c0, %c0_1, %c0_2] : memref<1x8x256xf32, #tpu.memory_space<vmem>>, vector<1x8x256xf32>
    %6 = vector.shape_cast %5 : vector<1x8x256xf32> to vector<8x256xf32>
    %7 = arith.truncf %6 : vector<8x256xf32> to vector<8x256xbf16>
    %c0_3 = arith.constant 0 : index
    %c0_4 = arith.constant 0 : index
    %c0_5 = arith.constant 0 : index
    %8 = vector.load %arg3[%c0_3, %c0_4, %c0_5] : memref<1x8x256xf32, #tpu.memory_space<vmem>>, vector<1x8x256xf32>
    %9 = vector.shape_cast %8 : vector<1x8x256xf32> to vector<8x256xf32>
    %10 = arith.truncf %9 : vector<8x256xf32> to vector<8x256xbf16>
    %c0_6 = arith.constant 0 : index
    %c0_7 = arith.constant 0 : index
    %11 = vector.load %arg4[%c0_6, %c0_7] : memref<32x8xbf16, #tpu.memory_space<vmem>>, vector<32x8xbf16>
    %cst = arith.constant dense<0.000000e+00> : vector<32x256xf32>
    %12 = tpu.matmul %11, %7, %cst {dimension_numbers = #tpu.dot_dimension_numbers<[1], [0], [0], [1], [0, 0, 1, 1], [], []>} : vector<32x8xbf16>, vector<8x256xbf16>, vector<32x256xf32> -> vector<32x256xf32>
    %c0_8 = arith.constant 0 : index
    %c0_9 = arith.constant 0 : index
    %13 = vector.load %arg5[%c0_8, %c0_9] : memref<32x8xbf16, #tpu.memory_space<vmem>>, vector<32x8xbf16>
    %cst_10 = arith.constant dense<0.000000e+00> : vector<32x256xf32>
    %14 = tpu.matmul %13, %10, %cst_10 {dimension_numbers = #tpu.dot_dimension_numbers<[1], [0], [0], [1], [0, 0, 1, 1], [], []>} : vector<32x8xbf16>, vector<8x256xbf16>, vector<32x256xf32> -> vector<32x256xf32>
    %15 = arith.addf %12, %14 : vector<32x256xf32>
    %c0_11 = arith.constant 0 : index
    %c0_12 = arith.constant 0 : index
    %16 = vector.load %arg6[%c0_11, %c0_12] : memref<32x1xf32, #tpu.memory_space<vmem>>, vector<32x1xf32>
    %17 = vector.broadcast %16 : vector<32x1xf32> to vector<32x256xf32>
    %18 = arith.addf %15, %17 : vector<32x256xf32>
    %cst_13 = arith.constant 0.000000e+00 : f32
    %19 = vector.broadcast %cst_13 : f32 to vector<32x256xf32>
    %20 = arith.maximumf %18, %19 : vector<32x256xf32>
    %c0_14 = arith.constant 0 : index
    %21 = arith.index_cast %1 : i32 to index
    %22 = vector.load %arg12[%c0_14, %21] : memref<32x256xf32, #tpu.memory_space<vmem>>, vector<32x256xf32>
    tpu.vector_store %arg12[%c0_14, %21], %20 {strides = array<i32>} : memref<32x256xf32, #tpu.memory_space<vmem>>, vector<32x256xf32>,
    %c0_15 = arith.constant 0 : index
    %c0_16 = arith.constant 0 : index
    %23 = arith.index_cast %1 : i32 to index
    %24 = vector.load %arg11[%c0_15, %c0_16, %23] : memref<1x8x256xf32, #tpu.memory_space<vmem>>, vector<1x8x256xf32>
    %25 = vector.shape_cast %24 : vector<1x8x256xf32> to vector<8x256xf32>
    %26 = vector.shape_cast %9 : vector<8x256xf32> to vector<1x8x256xf32>
    tpu.vector_store %arg11[%c0_15, %c0_16, %23], %26 {strides = array<i32>} : memref<1x8x256xf32, #tpu.memory_space<vmem>>, vector<1x8x256xf32>,
    %c0_17 = arith.constant 0 : index
    %c0_18 = arith.constant 0 : index
    %27 = vector.load %arg13[%c0_17, %c0_18] : memref<32x1xf32, #tpu.memory_space<vmem>>, vector<32x1xf32>
    %cst_19 = arith.constant dense<0.000000e+00> : vector<32xf32>
    %28 = vector.multi_reduction <add>, %20, %cst_19 [1] : vector<32x256xf32> to vector<32xf32>
    %29 = vector.shape_cast %28 : vector<32xf32> to vector<32x1xf32>
    %30 = arith.addf %27, %29 : vector<32x1xf32>
    %c0_20 = arith.constant 0 : index
    %c0_21 = arith.constant 0 : index
    %31 = vector.load %arg13[%c0_20, %c0_21] : memref<32x1xf32, #tpu.memory_space<vmem>>, vector<32x1xf32>
    tpu.vector_store %arg13[%c0_20, %c0_21], %30 {strides = array<i32>} : memref<32x1xf32, #tpu.memory_space<vmem>>, vector<32x1xf32>,
    %c0_i32_22 = arith.constant 0 : i32
    %32 = arith.cmpi eq, %arg1, %c0_i32_22 : i32
    %33 = arith.extui %32 : i1 to i32
    %c0_i32_23 = arith.constant 0 : i32
    %34 = arith.cmpi ne, %33, %c0_i32_23 : i32
    scf.if %34 {
      %c0_24 = arith.constant 0 : index
      %c0_25 = arith.constant 0 : index
      %35 = vector.load %arg13[%c0_24, %c0_25] : memref<32x1xf32, #tpu.memory_space<vmem>>, vector<32x1xf32>
      %cst_26 = arith.constant 3.906250e-03 : f32
      %36 = vector.broadcast %cst_26 : f32 to vector<32x1xf32>
      %37 = arith.mulf %35, %36 : vector<32x1xf32>
      %c0_27 = arith.constant 0 : index
      %c0_28 = arith.constant 0 : index
      %38 = vector.load %arg7[%c0_27, %c0_28] : memref<8x32xf32, #tpu.memory_space<vmem>>, vector<8x32xf32>
      %cst_29 = arith.constant dense<0.000000e+00> : vector<8x1xf32>
      %39 = tpu.matmul %38, %37, %cst_29 {dimension_numbers = #tpu.dot_dimension_numbers<[1], [0], [0], [1], [0, 0, 1, 1], [], []>} : vector<8x32xf32>, vector<32x1xf32>, vector<8x1xf32> -> vector<8x1xf32>
      %cst_30 = arith.constant 0.000000e+00 : f32
      %40 = vector.broadcast %cst_30 : f32 to vector<8x1xf32>
      %41 = arith.maximumf %39, %40 : vector<8x1xf32>
      %c0_31 = arith.constant 0 : index
      %c0_32 = arith.constant 0 : index
      %42 = vector.load %arg8[%c0_31, %c0_32] : memref<32x8xf32, #tpu.memory_space<vmem>>, vector<32x8xf32>
      %cst_33 = arith.constant dense<0.000000e+00> : vector<32x1xf32>
      %43 = tpu.matmul %42, %41, %cst_33 {dimension_numbers = #tpu.dot_dimension_numbers<[1], [0], [0], [1], [0, 0, 1, 1], [], []>} : vector<32x8xf32>, vector<8x1xf32>, vector<32x1xf32> -> vector<32x1xf32>
      %44 = arith.negf %43 : vector<32x1xf32>
      %45 = math.exp %44 : vector<32x1xf32>
      %cst_34 = arith.constant 1.000000e+00 : f32
      %46 = vector.broadcast %cst_34 : f32 to vector<32x1xf32>
      %47 = arith.addf %46, %45 : vector<32x1xf32>
      %48 = arith.divf %46, %47 : vector<32x1xf32>
      %c0_35 = arith.constant 0 : index
      %c0_36 = arith.constant 0 : index
      %49 = vector.load %arg9[%c0_35, %c0_36] : memref<32x1xf32, #tpu.memory_space<vmem>>, vector<32x1xf32>
      %50 = arith.mulf %48, %49 : vector<32x1xf32>
      %c0_i32_37 = arith.constant 0 : i32
      %c1_i32 = arith.constant 1 : i32
      %51 = arith.muli %c0_i32_37, %c1_i32 : i32
      %c0_i32_38 = arith.constant 0 : i32
      %52 = arith.addi %c0_i32_38, %51 : i32
      %c256_i32_39 = arith.constant 256 : i32
      %53 = arith.muli %52, %c256_i32_39 : i32
      %54 = tpu.assume_multiple %53, 128 : i32
      %c0_40 = arith.constant 0 : index
      %55 = arith.index_cast %54 : i32 to index
      %56 = vector.load %arg12[%c0_40, %55] : memref<32x256xf32, #tpu.memory_space<vmem>>, vector<32x256xf32>
      %57 = vector.broadcast %50 : vector<32x1xf32> to vector<32x256xf32>
      %58 = arith.mulf %56, %57 : vector<32x256xf32>
      %cst_41 = arith.constant dense<0.000000e+00> : vector<256xf32>
      %59 = vector.multi_reduction <add>, %58, %cst_41 [0] : vector<32x256xf32> to vector<256xf32>
      %60 = vector.shape_cast %59 : vector<256xf32> to vector<1x256xf32>
      %c0_42 = arith.constant 0 : index
      %c0_43 = arith.constant 0 : index
      %61 = vector.load %arg10[%c0_42, %c0_43] : memref<1x1xf32, #tpu.memory_space<vmem>>, vector<1x1xf32>
      %62 = vector.broadcast %61 : vector<1x1xf32> to vector<1x256xf32>
      %63 = arith.addf %60, %62 : vector<1x256xf32>
      %64 = arith.negf %63 : vector<1x256xf32>
      %65 = math.exp %64 : vector<1x256xf32>
      %cst_44 = arith.constant 1.000000e+00 : f32
      %66 = vector.broadcast %cst_44 : f32 to vector<1x256xf32>
      %67 = arith.addf %66, %65 : vector<1x256xf32>
      %68 = arith.divf %66, %67 : vector<1x256xf32>
      %c0_45 = arith.constant 0 : index
      %c0_46 = arith.constant 0 : index
      %69 = arith.index_cast %54 : i32 to index
      %70 = vector.load %arg11[%c0_45, %c0_46, %69] : memref<1x8x256xf32, #tpu.memory_space<vmem>>, vector<1x8x256xf32>
      %71 = vector.shape_cast %70 : vector<1x8x256xf32> to vector<8x256xf32>
      %72 = vector.broadcast %68 : vector<1x256xf32> to vector<8x256xf32>
      %73 = arith.mulf %71, %72 : vector<8x256xf32>
      %c0_47 = arith.constant 0 : index
      %c0_48 = arith.constant 0 : index
      %74 = arith.index_cast %54 : i32 to index
      %75 = vector.load %arg11[%c0_47, %c0_48, %74] : memref<1x8x256xf32, #tpu.memory_space<vmem>>, vector<1x8x256xf32>
      %76 = vector.shape_cast %75 : vector<1x8x256xf32> to vector<8x256xf32>
      %77 = vector.shape_cast %73 : vector<8x256xf32> to vector<1x8x256xf32>
      tpu.vector_store %arg11[%c0_47, %c0_48, %74], %77 {strides = array<i32>} : memref<1x8x256xf32, #tpu.memory_space<vmem>>, vector<1x8x256xf32>,
      %c1_i32_49 = arith.constant 1 : i32
    } else {
    }
    return
  }
  func.func @transform_0(%arg0: i32, %arg1: i32) -> (i32, i32, i32) {
    %c0_i32 = arith.constant 0 : i32
    %c0_i32_0 = arith.constant 0 : i32
    return %arg0, %c0_i32, %arg1 : i32, i32, i32
  }
  func.func @transform_1(%arg0: i32, %arg1: i32) -> (i32, i32, i32) {
    %c0_i32 = arith.constant 0 : i32
    %c0_i32_0 = arith.constant 0 : i32
    return %arg0, %c0_i32, %arg1 : i32, i32, i32
  }
  func.func @transform_2(%arg0: i32, %arg1: i32) -> (i32, i32) {
    %c0_i32 = arith.constant 0 : i32
    %c0_i32_0 = arith.constant 0 : i32
    %c0_i32_1 = arith.constant 0 : i32
    return %c0_i32, %c0_i32_0 : i32, i32
  }
  func.func @transform_3(%arg0: i32, %arg1: i32) -> (i32, i32) {
    %c0_i32 = arith.constant 0 : i32
    %c0_i32_0 = arith.constant 0 : i32
    %c0_i32_1 = arith.constant 0 : i32
    return %c0_i32, %c0_i32_0 : i32, i32
  }
  func.func @transform_4(%arg0: i32, %arg1: i32) -> (i32, i32) {
    %c0_i32 = arith.constant 0 : i32
    %c0_i32_0 = arith.constant 0 : i32
    %c0_i32_1 = arith.constant 0 : i32
    return %c0_i32, %c0_i32_0 : i32, i32
  }
  func.func @transform_5(%arg0: i32, %arg1: i32) -> (i32, i32) {
    %c0_i32 = arith.constant 0 : i32
    %c0_i32_0 = arith.constant 0 : i32
    %c0_i32_1 = arith.constant 0 : i32
    return %c0_i32, %c0_i32_0 : i32, i32
  }
  func.func @transform_6(%arg0: i32, %arg1: i32) -> (i32, i32) {
    %c0_i32 = arith.constant 0 : i32
    %c0_i32_0 = arith.constant 0 : i32
    %c0_i32_1 = arith.constant 0 : i32
    return %c0_i32, %c0_i32_0 : i32, i32
  }
  func.func @transform_7(%arg0: i32, %arg1: i32) -> (i32, i32) {
    %c0_i32 = arith.constant 0 : i32
    %c0_i32_0 = arith.constant 0 : i32
    %c0_i32_1 = arith.constant 0 : i32
    return %c0_i32, %c0_i32_0 : i32, i32
  }
  func.func @transform_8(%arg0: i32, %arg1: i32) -> (i32, i32) {
    %c0_i32 = arith.constant 0 : i32
    %c0_i32_0 = arith.constant 0 : i32
    %c0_i32_1 = arith.constant 0 : i32
    return %c0_i32, %c0_i32_0 : i32, i32
  }
  func.func @transform_9(%arg0: i32, %arg1: i32) -> (i32, i32, i32) {
    %c0_i32 = arith.constant 0 : i32
    %c0_i32_0 = arith.constant 0 : i32
    %c0_i32_1 = arith.constant 0 : i32
    return %arg0, %c0_i32, %c0_i32_0 : i32, i32, i32
  }
}

</mosaic_0001>

<llo_original>
// kernel: attention_block_se.1
$region0: #{attention_block_se.1}
  #allocation0 [shape = 'u32[]', space=smem, size = 0x4, offset = 0x4, fixed_abs, tag = 'smem constant byte address 0x4 - core index']
  #allocation1 [shape = 'u32[144,128]{1,0:T(1,128)}', space=vmem, size = 0x12000, scoped, tag = 'internal scratch']
  #allocation2 [shape = 'f32[32,256]{1,0:T(8,128)}', space=vmem, size = 0x8000, scoped, tag = 'scratch operand']
  #allocation3 [shape = 'f32[32,1]{1,0:T(8,128)}', space=vmem, size = 0x4000, scoped, tag = 'scratch operand']
  #allocation4 [shape = 'f32[1,1]{1,0:T(1,128)S(1)}', space=vmem, size = 0x200, scoped, tag = 'scoped memory for attention_block_se.1']
  %s0 = inlined_call_operand.hbm [shape: f32[2,8,256], index: 0, kind: input, shape index: {}]
  %s1 = inlined_call_operand.hbm [shape: f32[2,8,256], index: 1, kind: input, shape index: {}]
  %s2 = inlined_call_operand.hbm [shape: bf16[32,8], index: 2, kind: input, shape index: {}]
  %s3 = inlined_call_operand.hbm [shape: bf16[32,8], index: 3, kind: input, shape index: {}]
  %s4 = inlined_call_operand.hbm [shape: f32[32,1], index: 4, kind: input, shape index: {}]
  %s5 = inlined_call_operand.hbm [shape: f32[8,32], index: 5, kind: input, shape index: {}]
  %s6 = inlined_call_operand.hbm [shape: f32[32,8], index: 6, kind: input, shape index: {}]
  %s7 = inlined_call_operand.hbm [shape: f32[32,1], index: 7, kind: input, shape index: {}]
  %s8 = inlined_call_operand.<no memory space> [shape: f32[1,1], index: 8, kind: input, shape index: {}]
  %s9 = inlined_call_operand.hbm [shape: f32[2,8,256], index: 9, kind: output, shape index: {}]
  %s10 = sld [smem:[#allocation0]]
  $region109: #{attention_block_se.1} parent=0
    _
  %s12 = ssub.s32 1, %s10
  %s13 = scalar_select 0, %s12, %s10
  %v14 = vstv %s8
  %15 = vst [vmem:[#allocation4] sm:$0x1] %v14
  $region1: #{attention_block_se.1} parent=0
    #allocation5 [shape = 'u8[16384]{0}', space=vmem, size = 0x4000, scoped, tag = 'input window, operand 0']
    #allocation6 [shape = 's32[2]{0}', space=sflag, size = 0x8, scoped, tag = 'scoped memory for attention_block_se.1']
    #allocation7 [shape = 's32[2]{0}', space=sflag, size = 0x8, scoped, tag = 'scoped memory for attention_block_se.1']
    #allocation8 [shape = 'u8[16384]{0}', space=vmem, size = 0x4000, scoped, tag = 'input window, operand 1']
    #allocation9 [shape = 's32[2]{0}', space=sflag, size = 0x8, scoped, tag = 'scoped memory for attention_block_se.1']
    #allocation10 [shape = 'u8[8192]{0}', space=vmem, size = 0x2000, scoped, tag = 'input window, operand 2, single buffered']
    #allocation11 [shape = 'u8[8192]{0}', space=vmem, size = 0x2000, scoped, tag = 'input window, operand 3, single buffered']
    #allocation12 [shape = 's32[1]{0}', space=sflag, size = 0x4, scoped, tag = 'scoped memory for attention_block_se.1']
    #allocation13 [shape = 'u8[16384]{0}', space=vmem, size = 0x4000, scoped, tag = 'input window, operand 4, single buffered']
    #allocation14 [shape = 'u8[4096]{0}', space=vmem, size = 0x1000, scoped, tag = 'input window, operand 5, single buffered']
    #allocation15 [shape = 's32[1]{0}', space=sflag, size = 0x4, scoped, tag = 'scoped memory for attention_block_se.1']
    #allocation16 [shape = 'u8[16384]{0}', space=vmem, size = 0x4000, scoped, tag = 'input window, operand 6, single buffered']
    #allocation17 [shape = 'u8[16384]{0}', space=vmem, size = 0x4000, scoped, tag = 'input window, operand 7, single buffered']
    #allocation18 [shape = 's32[1]{0}', space=sflag, size = 0x4, scoped, tag = 'scoped memory for attention_block_se.1']
    #allocation19 [shape = 'u8[16384]{0}', space=vmem, size = 0x4000, scoped, tag = 'output window, operand 0']
    %16 = vsyncpa [#allocation6], 0
    %s17 = scalar_lea.sflag [#allocation6], 1
    %18 = vsyncpa %s17, 0
    %19 = vsyncpa [#allocation9], 0
    %s20 = scalar_lea.sflag [#allocation9], 1
    %21 = vsyncpa %s20, 0
    %22 = vsyncpa [#allocation12], 0
    %23 = vsyncpa [#allocation15], 0
    %24 = vsyncpa [#allocation18], 0
    %25 = vsyncpa [#allocation7], 0
    %s26 = scalar_lea.sflag [#allocation7], 1
    %27 = vsyncpa %s26, 0
    loop: start=0, step=1, limit=4
    $region2: #{attention_block_se.1} parent=1 // loop_pre_header
      _
    $region3: #{attention_block_se.1} parent=1 // loop_header
      %s29 = sphi 0, %s33
      %p30 = scmp.ge.s32.totalorder %s29, 4
      %s36 = sphi 0, %s48
      %s37 = sphi 0, %s44
      %s38 = sphi 0, %s36
      %s39 = sphi 0, %s37
      %s40 = sphi 0, %s38
      %s41 = sphi 0, %s39
      %s53 = sphi 0, %s55
      %s56 = sphi 0, %s53
      %s57 = sphi 0, %s56
      %s73 = sphi 0, %s57
      %s81 = sphi 0, %s83
      %s84 = sphi 0, %s81
      %s85 = sphi 0, %s84
      %s101 = sphi 0, %s85
      %s105 = sphi 0, %s105
      %s107 = sphi 0, %s105
      %s108 = sphi 0, %s107
      %s122 = sphi 0, %s108
      %s126 = sphi 0, %s126
      %s128 = sphi 0, %s126
      %s129 = sphi 0, %s128
      %s143 = sphi 0, %s129
      %s147 = sphi 0, %s147
      %s149 = sphi 0, %s147
      %s150 = sphi 0, %s149
      %s164 = sphi 0, %s150
      %s168 = sphi 0, %s168
      %s170 = sphi 0, %s168
      %s171 = sphi 0, %s170
      %s185 = sphi 0, %s171
      %s189 = sphi 0, %s189
      %s191 = sphi 0, %s189
      %s192 = sphi 0, %s191
      %s206 = sphi 0, %s192
      %s210 = sphi 0, %s210
      %s212 = sphi 0, %s210
      %s213 = sphi 0, %s212
      %s227 = sphi 0, %s213
      %s231 = sphi 0, %s231
      %s233 = sphi 0, %s231
      %s234 = sphi 0, %s233
      %s248 = sphi 0, %s234
      %s254 = sphi 0, %s256
      %s257 = sphi 0, %s254
      %s258 = sphi 0, %s257
      %s274 = sphi 0, %s258
    $region4: #{attention_block_se.1} parent=1 // loop_header_branch
      %32 = sbr.rel (%p30) target = $region8
    $region5: #{attention_block_se.1} parent=1 // loop_body
      %s34 = ssub.s32 %s29, 1
      %s35 = ssub.s32 %s29, 2
      %s42 = sadd.s32 1, %s37
      %p43 = scmp.ge.s32.totalorder %s42, 1
      %s44 = scalar_select %p43, 0, %s42
      %s45 = sadd.s32 1, %s36
      %s46 = scalar_select %p43, %s45, %s36
      %p47 = scmp.ge.s32.totalorder %s46, 2
      %s48 = scalar_select %p47, 0, %s46
      %s49 = ssub.s32 %s36, %s48
      %s50 = ssub.s32 %s37, %s44
      %s51 = sor.u32 %s49, %s50
      %p52 = scmp.eq.s32.totalorder %s51, 0
      %s54 = sadd.s32 %s53, 1
      %s55 = scalar_select %p52, %s53, %s54
      %p58 = pneg %p52
      %p59 = scmp.eq.s32.totalorder %s29, 1
      %p60 = por %p58, %p59
      %p61 = scmp.ne.s32.totalorder %s53, %s56
      %p62 = scmp.eq.s32.totalorder %s29, 0
      %p63 = por %p61, %p62
      %p64 = scmp.ne.s32.totalorder %s53, %s56
      %p65 = scmp.eq.s32.totalorder %s34, 1
      %p66 = por %p64, %p65
      %p67 = scmp.ne.s32.totalorder %s56, %s57
      %p68 = scmp.eq.s32.totalorder %s34, 0
      %p69 = por %p67, %p68
      %p70 = scmp.ne.s32.totalorder %s56, %s57
      %p71 = scmp.eq.s32.totalorder %s35, 1
      %p72 = por %p70, %p71
      %p74 = scmp.ne.s32.totalorder %s57, %s73
      %p75 = scmp.eq.s32.totalorder %s35, 0
      %p76 = por %p74, %p75
      %s77 = ssub.s32 %s36, %s48
      %s78 = ssub.s32 %s37, %s44
      %s79 = sor.u32 %s77, %s78
      %p80 = scmp.eq.s32.totalorder %s79, 0
      %s82 = sadd.s32 %s81, 1
      %s83 = scalar_select %p80, %s81, %s82
      %p86 = pneg %p80
      %p87 = scmp.eq.s32.totalorder %s29, 1
      %p88 = por %p86, %p87
      %p89 = scmp.ne.s32.totalorder %s81, %s84
      %p90 = scmp.eq.s32.totalorder %s29, 0
      %p91 = por %p89, %p90
      %p92 = scmp.ne.s32.totalorder %s81, %s84
      %p93 = scmp.eq.s32.totalorder %s34, 1
      %p94 = por %p92, %p93
      %p95 = scmp.ne.s32.totalorder %s84, %s85
      %p96 = scmp.eq.s32.totalorder %s34, 0
      %p97 = por %p95, %p96
      %p98 = scmp.ne.s32.totalorder %s84, %s85
      %p99 = scmp.eq.s32.totalorder %s35, 1
      %p100 = por %p98, %p99
      %p102 = scmp.ne.s32.totalorder %s85, %s101
      %p103 = scmp.eq.s32.totalorder %s35, 0
      %p104 = por %p102, %p103
      %s106 = sadd.s32 %s105, 1
      %p109 = scmp.eq.s32.totalorder %s29, 1
      %p110 = scmp.ne.s32.totalorder %s105, %s107
      %p111 = scmp.eq.s32.totalorder %s29, 0
      %p112 = por %p110, %p111
      %p113 = scmp.ne.s32.totalorder %s105, %s107
      %p114 = scmp.eq.s32.totalorder %s34, 1
      %p115 = por %p113, %p114
      %p116 = scmp.ne.s32.totalorder %s107, %s108
      %p117 = scmp.eq.s32.totalorder %s34, 0
      %p118 = por %p116, %p117
      %p119 = scmp.ne.s32.totalorder %s107, %s108
      %p120 = scmp.eq.s32.totalorder %s35, 1
      %p121 = por %p119, %p120
      %p123 = scmp.ne.s32.totalorder %s108, %s122
      %p124 = scmp.eq.s32.totalorder %s35, 0
      %p125 = por %p123, %p124
      %s127 = sadd.s32 %s126, 1
      %p130 = scmp.eq.s32.totalorder %s29, 1
      %p131 = scmp.ne.s32.totalorder %s126, %s128
      %p132 = scmp.eq.s32.totalorder %s29, 0
      %p133 = por %p131, %p132
      %p134 = scmp.ne.s32.totalorder %s126, %s128
      %p135 = scmp.eq.s32.totalorder %s34, 1
      %p136 = por %p134, %p135
      %p137 = scmp.ne.s32.totalorder %s128, %s129
      %p138 = scmp.eq.s32.totalorder %s34, 0
      %p139 = por %p137, %p138
      %p140 = scmp.ne.s32.totalorder %s128, %s129
      %p141 = scmp.eq.s32.totalorder %s35, 1
      %p142 = por %p140, %p141
      %p144 = scmp.ne.s32.totalorder %s129, %s143
      %p145 = scmp.eq.s32.totalorder %s35, 0
      %p146 = por %p144, %p145
      %s148 = sadd.s32 %s147, 1
      %p151 = scmp.eq.s32.totalorder %s29, 1
      %p152 = scmp.ne.s32.totalorder %s147, %s149
      %p153 = scmp.eq.s32.totalorder %s29, 0
      %p154 = por %p152, %p153
      %p155 = scmp.ne.s32.totalorder %s147, %s149
      %p156 = scmp.eq.s32.totalorder %s34, 1
      %p157 = por %p155, %p156
      %p158 = scmp.ne.s32.totalorder %s149, %s150
      %p159 = scmp.eq.s32.totalorder %s34, 0
      %p160 = por %p158, %p159
      %p161 = scmp.ne.s32.totalorder %s149, %s150
      %p162 = scmp.eq.s32.totalorder %s35, 1
      %p163 = por %p161, %p162
      %p165 = scmp.ne.s32.totalorder %s150, %s164
      %p166 = scmp.eq.s32.totalorder %s35, 0
      %p167 = por %p165, %p166
      %s169 = sadd.s32 %s168, 1
      %p172 = scmp.eq.s32.totalorder %s29, 1
      %p173 = scmp.ne.s32.totalorder %s168, %s170
      %p174 = scmp.eq.s32.totalorder %s29, 0
      %p175 = por %p173, %p174
      %p176 = scmp.ne.s32.totalorder %s168, %s170
      %p177 = scmp.eq.s32.totalorder %s34, 1
      %p178 = por %p176, %p177
      %p179 = scmp.ne.s32.totalorder %s170, %s171
      %p180 = scmp.eq.s32.totalorder %s34, 0
      %p181 = por %p179, %p180
      %p182 = scmp.ne.s32.totalorder %s170, %s171
      %p183 = scmp.eq.s32.totalorder %s35, 1
      %p184 = por %p182, %p183
      %p186 = scmp.ne.s32.totalorder %s171, %s185
      %p187 = scmp.eq.s32.totalorder %s35, 0
      %p188 = por %p186, %p187
      %s190 = sadd.s32 %s189, 1
      %p193 = scmp.eq.s32.totalorder %s29, 1
      %p194 = scmp.ne.s32.totalorder %s189, %s191
      %p195 = scmp.eq.s32.totalorder %s29, 0
      %p196 = por %p194, %p195
      %p197 = scmp.ne.s32.totalorder %s189, %s191
      %p198 = scmp.eq.s32.totalorder %s34, 1
      %p199 = por %p197, %p198
      %p200 = scmp.ne.s32.totalorder %s191, %s192
      %p201 = scmp.eq.s32.totalorder %s34, 0
      %p202 = por %p200, %p201
      %p203 = scmp.ne.s32.totalorder %s191, %s192
      %p204 = scmp.eq.s32.totalorder %s35, 1
      %p205 = por %p203, %p204
      %p207 = scmp.ne.s32.totalorder %s192, %s206
      %p208 = scmp.eq.s32.totalorder %s35, 0
      %p209 = por %p207, %p208
      %s211 = sadd.s32 %s210, 1
      %p214 = scmp.eq.s32.totalorder %s29, 1
      %p215 = scmp.ne.s32.totalorder %s210, %s212
      %p216 = scmp.eq.s32.totalorder %s29, 0
      %p217 = por %p215, %p216
      %p218 = scmp.ne.s32.totalorder %s210, %s212
      %p219 = scmp.eq.s32.totalorder %s34, 1
      %p220 = por %p218, %p219
      %p221 = scmp.ne.s32.totalorder %s212, %s213
      %p222 = scmp.eq.s32.totalorder %s34, 0
      %p223 = por %p221, %p222
      %p224 = scmp.ne.s32.totalorder %s212, %s213
      %p225 = scmp.eq.s32.totalorder %s35, 1
      %p226 = por %p224, %p225
      %p228 = scmp.ne.s32.totalorder %s213, %s227
      %p229 = scmp.eq.s32.totalorder %s35, 0
      %p230 = por %p228, %p229
      %s232 = sadd.s32 %s231, 1
      %p235 = scmp.eq.s32.totalorder %s29, 1
      %p236 = scmp.ne.s32.totalorder %s231, %s233
      %p237 = scmp.eq.s32.totalorder %s29, 0
      %p238 = por %p236, %p237
      %p239 = scmp.ne.s32.totalorder %s231, %s233
      %p240 = scmp.eq.s32.totalorder %s34, 1
      %p241 = por %p239, %p240
      %p242 = scmp.ne.s32.totalorder %s233, %s234
      %p243 = scmp.eq.s32.totalorder %s34, 0
      %p244 = por %p242, %p243
      %p245 = scmp.ne.s32.totalorder %s233, %s234
      %p246 = scmp.eq.s32.totalorder %s35, 1
      %p247 = por %p245, %p246
      %p249 = scmp.ne.s32.totalorder %s234, %s248
      %p250 = scmp.eq.s32.totalorder %s35, 0
      %p251 = por %p249, %p250
      %s252 = ssub.s32 %s36, %s48
      %p253 = scmp.eq.s32.totalorder %s252, 0
      %s255 = sadd.s32 %s254, 1
      %s256 = scalar_select %p253, %s254, %s255
      %p259 = pneg %p253
      %p260 = scmp.eq.s32.totalorder %s29, 1
      %p261 = por %p259, %p260
      %p262 = scmp.ne.s32.totalorder %s254, %s257
      %p263 = scmp.eq.s32.totalorder %s29, 0
      %p264 = por %p262, %p263
      %p265 = scmp.ne.s32.totalorder %s254, %s257
      %p266 = scmp.eq.s32.totalorder %s34, 1
      %p267 = por %p265, %p266
      %p268 = scmp.ne.s32.totalorder %s257, %s258
      %p269 = scmp.eq.s32.totalorder %s34, 0
      %p270 = por %p268, %p269
      %p271 = scmp.ne.s32.totalorder %s257, %s258
      %p272 = scmp.eq.s32.totalorder %s35, 1
      %p273 = por %p271, %p272
      %p275 = scmp.ne.s32.totalorder %s258, %s274
      %p276 = scmp.eq.s32.totalorder %s35, 0
      %p277 = por %p275, %p276
      %p278 = scmp.le.s32.totalorder 1, %s29
      %p279 = scmp.lt.s32.totalorder %s29, 3
      %p280 = pnand %p278, %p279
      %p281 = pneg %p280
      // Predicated region
      $region9: #{attention_block_se.1} parent=5 // pred_check
        _
      $region10: #{attention_block_se.1} parent=5 // pred_check_branch
        %283 = sbr.rel (%p280) target = $region12
      $region11: #{attention_block_se.1} parent=5 // pred_region
        %s284 = ssub.s32 %s29, 1
        // Predicated region
        $region13: #{attention_block_se.1} parent=11 // pred_check
          %p285 = pneg %p118
        $region14: #{attention_block_se.1} parent=11 // pred_check_branch
          %287 = sbr.rel (%p285) target = $region16
        $region15: #{attention_block_se.1} parent=11 // pred_region
          %s289 = ssub.s32 256, 256
          %290 = vsyncadd [#allocation9], %s289
          %s291 = sshll.u32 [#allocation10], 4
          %s292 = int_to_ptr.vmem [resolvable:$true] %s291
          %297 = dma.hbm_to_vmem [thread:$0]  %s2, 256, %s292, [#allocation9], 64, 64, 4
        $region16: #{attention_block_se.1} parent=11 // pred_fallthru
          _
        // Predicated region
        $region17: #{attention_block_se.1} parent=11 // pred_check
          %p298 = pneg %p139
        $region18: #{attention_block_se.1} parent=11 // pred_check_branch
          %300 = sbr.rel (%p298) target = $region20
        $region19: #{attention_block_se.1} parent=11 // pred_region
          %s302 = ssub.s32 256, 256
          %303 = vsyncadd [#allocation12], %s302
          %s304 = sshll.u32 [#allocation11], 4
          %s305 = int_to_ptr.vmem [resolvable:$true] %s304
          %310 = dma.hbm_to_vmem [thread:$0]  %s3, 256, %s305, [#allocation12], 64, 64, 4
        $region20: #{attention_block_se.1} parent=11 // pred_fallthru
          _
        // Predicated region
        $region21: #{attention_block_se.1} parent=11 // pred_check
          %p311 = pneg %p160
        $region22: #{attention_block_se.1} parent=11 // pred_check_branch
          %313 = sbr.rel (%p311) target = $region24
        $region23: #{attention_block_se.1} parent=11 // pred_region
          %s315 = ssub.s32 512, 512
          %316 = vsyncadd [#allocation12], %s315
          %s317 = sshll.u32 [#allocation13], 4
          %s318 = int_to_ptr.vmem [resolvable:$true] %s317
          %323 = dma.hbm_to_vmem [thread:$0]  %s4, 512, %s318, [#allocation12], 128, 128, 8
        $region24: #{attention_block_se.1} parent=11 // pred_fallthru
          _
        // Predicated region
        $region25: #{attention_block_se.1} parent=11 // pred_check
          %p324 = pneg %p181
        $region26: #{attention_block_se.1} parent=11 // pred_check_branch
          %326 = sbr.rel (%p324) target = $region28
        $region27: #{attention_block_se.1} parent=11 // pred_region
          %s328 = ssub.s32 128, 128
          %329 = vsyncadd [#allocation15], %s328
          %s331 = sshll.u32 [#allocation14], 4
          %s332 = int_to_ptr.vmem [resolvable:$true] %s331
          %334 = dma.hbm_to_vmem [thread:$0]  %s5, 128, %s332, [#allocation15]
        $region28: #{attention_block_se.1} parent=11 // pred_fallthru
          _
        // Predicated region
        $region29: #{attention_block_se.1} parent=11 // pred_check
          %p335 = pneg %p202
        $region30: #{attention_block_se.1} parent=11 // pred_check_branch
          %337 = sbr.rel (%p335) target = $region32
        $region31: #{attention_block_se.1} parent=11 // pred_region
          %s339 = ssub.s32 512, 512
          %340 = vsyncadd [#allocation15], %s339
          %s341 = sshll.u32 [#allocation16], 4
          %s342 = int_to_ptr.vmem [resolvable:$true] %s341
          %347 = dma.hbm_to_vmem [thread:$0]  %s6, 512, %s342, [#allocation15], 128, 128, 8
        $region32: #{attention_block_se.1} parent=11 // pred_fallthru
          _
        // Predicated region
        $region33: #{attention_block_se.1} parent=11 // pred_check
          %p348 = pneg %p223
        $region34: #{attention_block_se.1} parent=11 // pred_check_branch
          %350 = sbr.rel (%p348) target = $region36
        $region35: #{attention_block_se.1} parent=11 // pred_region
          %s352 = ssub.s32 512, 512
          %353 = vsyncadd [#allocation18], %s352
          %s354 = sshll.u32 [#allocation17], 4
          %s355 = int_to_ptr.vmem [resolvable:$true] %s354
          %360 = dma.hbm_to_vmem [thread:$0]  %s7, 512, %s355, [#allocation18], 128, 128, 8
        $region36: #{attention_block_se.1} parent=11 // pred_fallthru
          _
        // Predicated region
        $region37: #{attention_block_se.1} parent=11 // pred_check
          %p361 = pneg %p244
        $region38: #{attention_block_se.1} parent=11 // pred_check_branch
          %363 = sbr.rel (%p361) target = $region40
        $region39: #{attention_block_se.1} parent=11 // pred_region
          _
        $region40: #{attention_block_se.1} parent=11 // pred_fallthru
          _
      $region12: #{attention_block_se.1} parent=5 // pred_fallthru
        _
      %p364 = scmp.lt.s32.totalorder %s29, 2
      // Predicated region
      $region41: #{attention_block_se.1} parent=5 // pred_check
        %p365 = pneg %p364
      $region42: #{attention_block_se.1} parent=5 // pred_check_branch
        %367 = sbr.rel (%p365) target = $region44
      $region43: #{attention_block_se.1} parent=5 // pred_region
        // Predicated region
        $region45: #{attention_block_se.1} parent=43 // pred_check
          %p368 = pneg %p63
        $region46: #{attention_block_se.1} parent=43 // pred_check_branch
          %370 = sbr.rel (%p368) target = $region48
        $region47: #{attention_block_se.1} parent=43 // pred_region
          %s371 = sand.u32 %s53, 1
          %s372 = scalar_lea.sflag [#allocation6], %s371
          %s373 = sand.u32 %s53, 1
          %s374 = smul.addr %s373, 16
          %s375 = scalar_lea.vmem [#allocation5], %s374
          %s376 = smul.u32 2, %s37
          %s378 = ssub.s32 256, 256
          %379 = vsyncadd %s372, %s378
          %s380 = smul.addr %s36, 2
          %s381 = sadd.s32 %s376, %s380
          %s382 = smul.addr %s381, 128
          %s383 = scalar_lea.hbm %s0, %s382
          %s385 = sshll.u32 %s375, 4
          %s386 = int_to_ptr.vmem [resolvable:$true] %s385
          %388 = dma.hbm_to_vmem [thread:$0]  %s383, 256, %s386, %s372
        $region48: #{attention_block_se.1} parent=43 // pred_fallthru
          _
        // Predicated region
        $region49: #{attention_block_se.1} parent=43 // pred_check
          %p389 = pneg %p91
        $region50: #{attention_block_se.1} parent=43 // pred_check_branch
          %391 = sbr.rel (%p389) target = $region52
        $region51: #{attention_block_se.1} parent=43 // pred_region
          %s392 = sand.u32 %s29, 1
          %s393 = scalar_lea.sflag [#allocation9], %s392
          %s394 = sand.u32 %s81, 1
          %s395 = smul.addr %s394, 16
          %s396 = scalar_lea.vmem [#allocation8], %s395
          %s397 = smul.u32 2, %s37
          %s399 = ssub.s32 256, 256
          %400 = vsyncadd %s393, %s399
          %s401 = smul.addr %s36, 2
          %s402 = sadd.s32 %s397, %s401
          %s403 = smul.addr %s402, 128
          %s404 = scalar_lea.hbm %s1, %s403
          %s406 = sshll.u32 %s396, 4
          %s407 = int_to_ptr.vmem [resolvable:$true] %s406
          %409 = dma.hbm_to_vmem [thread:$0]  %s404, 256, %s407, %s393
        $region52: #{attention_block_se.1} parent=43 // pred_fallthru
          _
      $region44: #{attention_block_se.1} parent=5 // pred_fallthru
        _
      %p410 = scmp.le.s32.totalorder 1, %s29
      %p411 = scmp.lt.s32.totalorder %s29, 3
      %p412 = pnand %p410, %p411
      %p413 = pneg %p412
      // Predicated region
      $region53: #{attention_block_se.1} parent=5 // pred_check
        _
      $region54: #{attention_block_se.1} parent=5 // pred_check_branch
        %415 = sbr.rel (%p412) target = $region56
      $region55: #{attention_block_se.1} parent=5 // pred_region
        %s416 = ssub.s32 %s29, 1
        %s417 = sand.u32 %s56, 1
        %s418 = scalar_lea.sflag [#allocation6], %s417
        %s419 = sand.u32 %s56, 1
        %s420 = smul.addr %s419, 16
        %s421 = scalar_lea.vmem [#allocation5], %s420
        // Predicated region
        $region57: #{attention_block_se.1} parent=55 // pred_check
          %p422 = pneg %p69
        $region58: #{attention_block_se.1} parent=55 // pred_check_branch
          %424 = sbr.rel (%p422) target = $region60
        $region59: #{attention_block_se.1} parent=55 // pred_region
          %425 = dma.done %s418, 256
        $region60: #{attention_block_se.1} parent=55 // pred_fallthru
          _
        %s426 = sand.u32 %s34, 1
        %s427 = scalar_lea.sflag [#allocation9], %s426
        %s428 = sand.u32 %s84, 1
        %s429 = smul.addr %s428, 16
        %s430 = scalar_lea.vmem [#allocation8], %s429
        // Predicated region
        $region61: #{attention_block_se.1} parent=55 // pred_check
          %p431 = pneg %p97
        $region62: #{attention_block_se.1} parent=55 // pred_check_branch
          %433 = sbr.rel (%p431) target = $region64
        $region63: #{attention_block_se.1} parent=55 // pred_region
          %434 = dma.done %s427, 256
        $region64: #{attention_block_se.1} parent=55 // pred_fallthru
          _
        // Predicated region
        $region65: #{attention_block_se.1} parent=55 // pred_check
          %p435 = pneg %p118
        $region66: #{attention_block_se.1} parent=55 // pred_check_branch
          %437 = sbr.rel (%p435) target = $region68
        $region67: #{attention_block_se.1} parent=55 // pred_region
          %438 = dma.done [#allocation9], 256
        $region68: #{attention_block_se.1} parent=55 // pred_fallthru
          _
        // Predicated region
        $region69: #{attention_block_se.1} parent=55 // pred_check
          %p439 = pneg %p139
        $region70: #{attention_block_se.1} parent=55 // pred_check_branch
          %441 = sbr.rel (%p439) target = $region72
        $region71: #{attention_block_se.1} parent=55 // pred_region
          %442 = dma.done [#allocation12], 256
        $region72: #{attention_block_se.1} parent=55 // pred_fallthru
          _
        // Predicated region
        $region73: #{attention_block_se.1} parent=55 // pred_check
          %p443 = pneg %p160
        $region74: #{attention_block_se.1} parent=55 // pred_check_branch
          %445 = sbr.rel (%p443) target = $region76
        $region75: #{attention_block_se.1} parent=55 // pred_region
          %446 = dma.done [#allocation12], 512
        $region76: #{attention_block_se.1} parent=55 // pred_fallthru
          _
        // Predicated region
        $region77: #{attention_block_se.1} parent=55 // pred_check
          %p447 = pneg %p181
        $region78: #{attention_block_se.1} parent=55 // pred_check_branch
          %449 = sbr.rel (%p447) target = $region80
        $region79: #{attention_block_se.1} parent=55 // pred_region
          %450 = dma.done [#allocation15], 128
        $region80: #{attention_block_se.1} parent=55 // pred_fallthru
          _
        // Predicated region
        $region81: #{attention_block_se.1} parent=55 // pred_check
          %p451 = pneg %p202
        $region82: #{attention_block_se.1} parent=55 // pred_check_branch
          %453 = sbr.rel (%p451) target = $region84
        $region83: #{attention_block_se.1} parent=55 // pred_region
          %454 = dma.done [#allocation15], 512
        $region84: #{attention_block_se.1} parent=55 // pred_fallthru
          _
        // Predicated region
        $region85: #{attention_block_se.1} parent=55 // pred_check
          %p455 = pneg %p223
        $region86: #{attention_block_se.1} parent=55 // pred_check_branch
          %457 = sbr.rel (%p455) target = $region88
        $region87: #{attention_block_se.1} parent=55 // pred_region
          %458 = dma.done [#allocation18], 512
        $region88: #{attention_block_se.1} parent=55 // pred_fallthru
          _
        %s459 = sand.u32 %s56, 1
        %s460 = scalar_lea.sflag [#allocation6], %s459
        %s461 = sand.u32 %s56, 1
        %s462 = smul.addr %s461, 16
        %s463 = scalar_lea.vmem [#allocation5], %s462
        %p464 = pneg %p69
        %p465 = pneg %p66
        %s466 = sand.u32 %s34, 1
        %s467 = scalar_lea.sflag [#allocation9], %s466
        %s468 = sand.u32 %s84, 1
        %s469 = smul.addr %s468, 16
        %s470 = scalar_lea.vmem [#allocation8], %s469
        %p471 = pneg %p97
        %p472 = pneg %p94
        %p473 = pneg %p118
        %p474 = pneg %p115
        %p475 = pneg %p139
        %p476 = pneg %p136
        %p477 = pneg %p160
        %p478 = pneg %p157
        %p479 = pneg %p181
        %p480 = pneg %p178
        %p481 = pneg %p202
        %p482 = pneg %p199
        %p483 = pneg %p223
        %p484 = pneg %p220
        %p485 = pneg %p244
        %p486 = pneg %p241
        %p487 = pneg %p270
        %p488 = pneg %p267
        %s489 = sand.u32 %s257, 1
        %s490 = scalar_lea.sflag [#allocation7], %s489
        %s491 = sand.u32 %s257, 1
        %s492 = smul.addr %s491, 16
        %s493 = scalar_lea.vmem [#allocation19], %s492
        %s494 = smul.u32 2, %s39
        %s495 = smul.u32 2, %s39
        %s497 = smul.u32 %s39, 256
        %p498 = scmp.eq.s32.totalorder %s39, 0
        // Predicated region
        $region89: #{attention_block_se.1} parent=55 // pred_check
          %p499 = pneg %p498
        $region90: #{attention_block_se.1} parent=55 // pred_check_branch
          %501 = sbr.rel (%p499) target = $region92
        $region91: #{attention_block_se.1} parent=55 // pred_region
          %vm502 = vcmask 7168
          %503 = vst.msk [vmem:[#allocation3] sm:$0xff] %vm502, 0.0
          %504 = vst.msk [vmem:[#allocation3 + $0x8] sm:$0xff] %vm502, 0.0
          %505 = vst.msk [vmem:[#allocation3 + $0x10] sm:$0xff] %vm502, 0.0
          %506 = vst.msk [vmem:[#allocation3 + $0x18] sm:$0xff] %vm502, 0.0
        $region92: #{attention_block_se.1} parent=55 // pred_fallthru
          _
        %v507 = vld [vmem:[%s421] sm:$0xff]
        %v508 = vld [vmem:[%s421 + $0x8] sm:$0xff]
        %v509 = vpack.c.bf16 %v507, %v507
        %v510 = vpack.c.bf16 %v508, %v508
        %v511 = vld [vmem:[%s430] sm:$0xff]
        %v512 = vld [vmem:[%s430 + $0x8] sm:$0xff]
        %v513 = vpack.c.bf16 %v511, %v511
        %v514 = vpack.c.bf16 %v512, %v512
        %v515 = vld [vmem:[#allocation10] sm:$0xf]
        %v516 = vld [vmem:[#allocation10 + $0x4] sm:$0xf]
        %v517 = vld [vmem:[#allocation10 + $0x8] sm:$0xf]
        %v518 = vld [vmem:[#allocation10 + $0xc] sm:$0xf]
        %v519 = vld [vmem:[#allocation11] sm:$0xf]
        %v520 = vld [vmem:[#allocation11 + $0x4] sm:$0xf]
        %v521 = vld [vmem:[#allocation11 + $0x8] sm:$0xf]
        %v522 = vld [vmem:[#allocation11 + $0xc] sm:$0xf]
        %v527 = vunpack.c.l.b16 %v519
        %v528 = vunpack.c.l.b16 %v520
        %v529 = vunpack.c.l.b16 %v521
        %v530 = vunpack.c.l.b16 %v522
        %v531 = vpack.c.b16 %v528, %v527
        %v532 = vpack.c.b16 %v530, %v529
        %vm533 = vcmask 64512
        %v535 = vsel %vm533, %v531, 0
        %v538 = vsel %vm533, %v532, 0
        %vm540 = vcmask 1043456
        %v542 = vsel %vm540, %v513, 0
        %v545 = vsel %vm540, %v514, 0
        %547 = vmatprep.subr.bf16.mxu0 %v545
        %548 = vmatpush1.bf16.msra.mxu0 %v542
        %549 = vmatprep.subr.bf16.mxu0 0
        %550 = vmatpush1.bf16.msra.mxu0 0
        %551 = vmatprep.subr.bf16.mxu0 0
        %552 = vmatpush1.bf16.msra.mxu0 0
        %553 = vmatprep.subr.bf16.mxu0 0
        %554 = vmatpush1.bf16.msra.mxu0 0
        %555 = vmatprep.subr.bf16.mxu0 0
        %556 = vmatpush1.bf16.msra.mxu0 0
        %557 = vmatprep.subr.bf16.mxu0 0
        %558 = vmatpush1.bf16.msra.mxu0 0
        %559 = vmatprep.subr.bf16.mxu0 0
        %560 = vmatpush1.bf16.msra.mxu0 0
        %561 = vmatprep.subr.bf16.mxu0 0
        %562 = vmatpush1.bf16.msra.mxu0 0
        %563 = vmatprep.subr.bf16.mxu0 0
        %564 = vmatpush1.bf16.msra.mxu0 0
        %565 = vmatprep.subr.bf16.mxu0 0
        %566 = vmatpush1.bf16.msra.mxu0 0
        %567 = vmatprep.subr.bf16.mxu0 0
        %568 = vmatpush1.bf16.msra.mxu0 0
        %569 = vmatprep.subr.bf16.mxu0 0
        %570 = vmatpush1.bf16.msra.mxu0 0
        %571 = vmatprep.subr.bf16.mxu0 0
        %572 = vmatpush1.bf16.msra.mxu0 0
        %573 = vmatprep.subr.bf16.mxu0 0
        %574 = vmatpush1.bf16.msra.mxu0 0
        %575 = vmatprep.subr.bf16.mxu0 0
        %576 = vmatpush1.bf16.msra.mxu0 0
        %577 = vmatprep.subr.bf16.mxu0 0
        %578 = vmatpush1.bf16.msra.mxu0 0
        %579 = vmatprep.mubr.bf16.mxu0 0
        %580 = vmatmul.mubr.bf16.gmra.mrb[0].mxu0 %v535
        %v581 = vpop.f32.mrb[0].mxu0
        %v582 = vadd.f32 0.0, %v581
        %v583 = vpop.f32.mrb[0].mxu0
        %v584 = vadd.f32 0.0, %v583
        %v585 = vpop.f32.mrb[0].mxu0
        %v586 = vadd.f32 0.0, %v585
        %v587 = vpop.f32.mrb[0].mxu0
        %v588 = vadd.f32 0.0, %v587
        %589 = vmatprep.mubr.bf16.mxu0 0
        %590 = vmatmul.mubr.bf16.gmra.mrb[0].mxu0 %v538
        %v591 = vpop.f32.mrb[0].mxu0
        %v592 = vadd.f32 0.0, %v591
        %v593 = vpop.f32.mrb[0].mxu0
        %v594 = vadd.f32 0.0, %v593
        %v595 = vpop.f32.mrb[0].mxu0
        %v596 = vadd.f32 0.0, %v595
        %v597 = vpop.f32.mrb[0].mxu0
        %v598 = vadd.f32 0.0, %v597
        %599 = vdwg.mxu0
        %v604 = vunpack.c.l.b16 %v515
        %v605 = vunpack.c.l.b16 %v516
        %v606 = vunpack.c.l.b16 %v517
        %v607 = vunpack.c.l.b16 %v518
        %v608 = vpack.c.b16 %v605, %v604
        %v609 = vpack.c.b16 %v607, %v606
        %v611 = vsel %vm533, %v608, 0
        %v614 = vsel %vm533, %v609, 0
        %v617 = vsel %vm540, %v509, 0
        %v620 = vsel %vm540, %v510, 0
        %622 = vmatprep.subr.bf16.mxu0 %v620
        %623 = vmatpush1.bf16.msra.mxu0 %v617
        %624 = vmatprep.subr.bf16.mxu0 0
        %625 = vmatpush1.bf16.msra.mxu0 0
        %626 = vmatprep.subr.bf16.mxu0 0
        %627 = vmatpush1.bf16.msra.mxu0 0
        %628 = vmatprep.subr.bf16.mxu0 0
        %629 = vmatpush1.bf16.msra.mxu0 0
        %630 = vmatprep.subr.bf16.mxu0 0
        %631 = vmatpush1.bf16.msra.mxu0 0
        %632 = vmatprep.subr.bf16.mxu0 0
        %633 = vmatpush1.bf16.msra.mxu0 0
        %634 = vmatprep.subr.bf16.mxu0 0
        %635 = vmatpush1.bf16.msra.mxu0 0
        %636 = vmatprep.subr.bf16.mxu0 0
        %637 = vmatpush1.bf16.msra.mxu0 0
        %638 = vmatprep.subr.bf16.mxu0 0
        %639 = vmatpush1.bf16.msra.mxu0 0
        %640 = vmatprep.subr.bf16.mxu0 0
        %641 = vmatpush1.bf16.msra.mxu0 0
        %642 = vmatprep.subr.bf16.mxu0 0
        %643 = vmatpush1.bf16.msra.mxu0 0
        %644 = vmatprep.subr.bf16.mxu0 0
        %645 = vmatpush1.bf16.msra.mxu0 0
        %646 = vmatprep.subr.bf16.mxu0 0
        %647 = vmatpush1.bf16.msra.mxu0 0
        %648 = vmatprep.subr.bf16.mxu0 0
        %649 = vmatpush1.bf16.msra.mxu0 0
        %650 = vmatprep.subr.bf16.mxu0 0
        %651 = vmatpush1.bf16.msra.mxu0 0
        %652 = vmatprep.subr.bf16.mxu0 0
        %653 = vmatpush1.bf16.msra.mxu0 0
        %654 = vmatprep.mubr.bf16.mxu0 0
        %655 = vmatmul.mubr.bf16.gmra.mrb[0].mxu0 %v611
        %v656 = vpop.f32.mrb[0].mxu0
        %v657 = vadd.f32 %v582, %v656
        %v658 = vpop.f32.mrb[0].mxu0
        %v659 = vadd.f32 %v584, %v658
        %v660 = vpop.f32.mrb[0].mxu0
        %v661 = vadd.f32 %v586, %v660
        %v662 = vpop.f32.mrb[0].mxu0
        %v663 = vadd.f32 %v588, %v662
        %664 = vmatprep.mubr.bf16.mxu0 0
        %665 = vmatmul.mubr.bf16.gmra.mrb[0].mxu0 %v614
        %v666 = vpop.f32.mrb[0].mxu0
        %v667 = vadd.f32 %v592, %v666
        %v668 = vpop.f32.mrb[0].mxu0
        %v669 = vadd.f32 %v594, %v668
        %v670 = vpop.f32.mrb[0].mxu0
        %v671 = vadd.f32 %v596, %v670
        %v672 = vpop.f32.mrb[0].mxu0
        %v673 = vadd.f32 %v598, %v672
        %674 = vdwg.mxu0
        %v675 = vld [vmem:[#allocation13] sm:$0xff]
        %v676 = vld [vmem:[#allocation13 + $0x8] sm:$0xff]
        %v677 = vld [vmem:[#allocation13 + $0x10] sm:$0xff]
        %v678 = vld [vmem:[#allocation13 + $0x18] sm:$0xff]
        %680 = vset.pattern.permute.xlu0 0
        %681 = vperm.xlu0 %680, %v675
        %v682 = vpop.permute.xlu0 %681
        %685 = vset.pattern.permute.xlu0 0
        %686 = vperm.xlu0 %685, %v676
        %v687 = vpop.permute.xlu0 %686
        %690 = vset.pattern.permute.xlu0 0
        %691 = vperm.xlu0 %690, %v677
        %v692 = vpop.permute.xlu0 %691
        %695 = vset.pattern.permute.xlu0 0
        %696 = vperm.xlu0 %695, %v678
        %v697 = vpop.permute.xlu0 %696
        %v699 = vadd.f32 %v657, %v682
        %v700 = vadd.f32 %v659, %v682
        %v701 = vadd.f32 %v661, %v687
        %v702 = vadd.f32 %v663, %v687
        %v703 = vadd.f32 %v667, %v692
        %v704 = vadd.f32 %v669, %v692
        %v705 = vadd.f32 %v671, %v697
        %v706 = vadd.f32 %v673, %v697
        %v707 = vmax.f32 %v699, 0.0
        %v708 = vmax.f32 %v700, 0.0
        %v709 = vmax.f32 %v701, 0.0
        %v710 = vmax.f32 %v702, 0.0
        %v711 = vmax.f32 %v703, 0.0
        %v712 = vmax.f32 %v704, 0.0
        %v713 = vmax.f32 %v705, 0.0
        %v714 = vmax.f32 %v706, 0.0
        %s715 = sshra.s32 %s497, 7
        %s716 = sand.u32 %s497, 127
        %s717 = smul.addr %s715, 8
        %s718 = scalar_lea.vmem [#allocation2], %s717
        %719 = vst [vmem:[%s718] sm:$0xff] %v707
        %720 = vst [vmem:[%s718 + $0x8] sm:$0xff] %v708
        %721 = vst [vmem:[%s718 + $0x10] sm:$0xff] %v709
        %722 = vst [vmem:[%s718 + $0x18] sm:$0xff] %v710
        %723 = vst [vmem:[%s718 + $0x20] sm:$0xff] %v711
        %724 = vst [vmem:[%s718 + $0x28] sm:$0xff] %v712
        %725 = vst [vmem:[%s718 + $0x30] sm:$0xff] %v713
        %726 = vst [vmem:[%s718 + $0x38] sm:$0xff] %v714
        %s727 = smul.addr %s715, 8
        %s728 = scalar_lea.vmem %s493, %s727 [#allocation19]
        %729 = vst [vmem:[%s728] sm:$0xff] %v511
        %730 = vst [vmem:[%s728 + $0x8] sm:$0xff] %v512
        %v731 = vld [vmem:[#allocation3] sm:$0xff]
        %v732 = vld [vmem:[#allocation3 + $0x8] sm:$0xff]
        %v733 = vld [vmem:[#allocation3 + $0x10] sm:$0xff]
        %v734 = vld [vmem:[#allocation3 + $0x18] sm:$0xff]
        %v735 = vadd.f32 %v707, %v708
        %736 = vadd.xlane.f32.xlu0 %v735
        %v737 = vpop.xlane.xlu0 %736
        %v738 = vadd.f32 %v709, %v710
        %739 = vadd.xlane.f32.xlu0 %v738
        %v740 = vpop.xlane.xlu0 %739
        %v741 = vadd.f32 %v711, %v712
        %742 = vadd.xlane.f32.xlu0 %v741
        %v743 = vpop.xlane.xlu0 %742
        %v744 = vadd.f32 %v713, %v714
        %745 = vadd.xlane.f32.xlu0 %v744
        %v746 = vpop.xlane.xlu0 %745
        %v747 = vadd.f32 %v731, %v737
        %v748 = vadd.f32 %v732, %v740
        %v749 = vadd.f32 %v733, %v743
        %v750 = vadd.f32 %v734, %v746
        %vm751 = vcmask 7168
        %752 = vst.msk [vmem:[#allocation3] sm:$0xff] %vm751, %v747
        %753 = vst.msk [vmem:[#allocation3 + $0x8] sm:$0xff] %vm751, %v748
        %754 = vst.msk [vmem:[#allocation3 + $0x10] sm:$0xff] %vm751, %v749
        %755 = vst.msk [vmem:[#allocation3 + $0x18] sm:$0xff] %vm751, %v750
        // Predicated region
        $region93: #{attention_block_se.1} parent=55 // pred_check
          %p756 = pneg %p498
        $region94: #{attention_block_se.1} parent=55 // pred_check_branch
          %758 = sbr.rel (%p756) target = $region96
        $region95: #{attention_block_se.1} parent=55 // pred_region
          %v759 = vld [vmem:[#allocation3] sm:$0xff]
          %v760 = vld [vmem:[#allocation3 + $0x8] sm:$0xff]
          %v761 = vld [vmem:[#allocation3 + $0x10] sm:$0xff]
          %v762 = vld [vmem:[#allocation3 + $0x18] sm:$0xff]
          %v763 = vmul.f32 %v759, 0.00390625
          %v764 = vmul.f32 %v760, 0.00390625
          %v765 = vmul.f32 %v761, 0.00390625
          %v766 = vmul.f32 %v762, 0.00390625
          %v767 = vld [vmem:[#allocation14] sm:$0xff]
          %vm768 = vcmask 261120
          %v770 = vsel %vm768, %v767, 0
          %772 = vmatprep.subr.mxu0 0.0
          %773 = vmatpush1.msra.mxu0 %v763
          %774 = vmatprep.subr.mxu0 0.0
          %775 = vmatpush1.msra.mxu0 %v764
          %776 = vmatprep.subr.mxu0 0.0
          %777 = vmatpush1.msra.mxu0 %v765
          %778 = vmatprep.subr.mxu0 0.0
          %779 = vmatpush1.msra.mxu0 %v766
          %780 = vmatprep.subr.mxu0 0.0
          %781 = vmatpush1.msra.mxu0 0.0
          %782 = vmatprep.subr.mxu0 0.0
          %783 = vmatpush1.msra.mxu0 0.0
          %784 = vmatprep.subr.mxu0 0.0
          %785 = vmatpush1.msra.mxu0 0.0
          %786 = vmatprep.subr.mxu0 0.0
          %787 = vmatpush1.msra.mxu0 0.0
          %788 = vmatprep.subr.mxu0 0.0
          %789 = vmatpush1.msra.mxu0 0.0
          %790 = vmatprep.subr.mxu0 0.0
          %791 = vmatpush1.msra.mxu0 0.0
          %792 = vmatprep.subr.mxu0 0.0
          %793 = vmatpush1.msra.mxu0 0.0
          %794 = vmatprep.subr.mxu0 0.0
          %795 = vmatpush1.msra.mxu0 0.0
          %796 = vmatprep.subr.mxu0 0.0
          %797 = vmatpush1.msra.mxu0 0.0
          %798 = vmatprep.subr.mxu0 0.0
          %799 = vmatpush1.msra.mxu0 0.0
          %800 = vmatprep.subr.mxu0 0.0
          %801 = vmatpush1.msra.mxu0 0.0
          %802 = vmatprep.subr.mxu0 0.0
          %803 = vmatpush1.msra.mxu0 0.0
          %804 = vmatprep.subr.mxu0 0.0
          %805 = vmatpush1.msra.mxu0 0.0
          %806 = vmatprep.subr.mxu0 0.0
          %807 = vmatpush1.msra.mxu0 0.0
          %808 = vmatprep.subr.mxu0 0.0
          %809 = vmatpush1.msra.mxu0 0.0
          %810 = vmatprep.subr.mxu0 0.0
          %811 = vmatpush1.msra.mxu0 0.0
          %812 = vmatprep.subr.mxu0 0.0
          %813 = vmatpush1.msra.mxu0 0.0
          %814 = vmatprep.subr.mxu0 0.0
          %815 = vmatpush1.msra.mxu0 0.0
          %816 = vmatprep.subr.mxu0 0.0
          %817 = vmatpush1.msra.mxu0 0.0
          %818 = vmatprep.subr.mxu0 0.0
          %819 = vmatpush1.msra.mxu0 0.0
          %820 = vmatprep.subr.mxu0 0.0
          %821 = vmatpush1.msra.mxu0 0.0
          %822 = vmatprep.subr.mxu0 0.0
          %823 = vmatpush1.msra.mxu0 0.0
          %824 = vmatprep.subr.mxu0 0.0
          %825 = vmatpush1.msra.mxu0 0.0
          %826 = vmatprep.subr.mxu0 0.0
          %827 = vmatpush1.msra.mxu0 0.0
          %828 = vmatprep.subr.mxu0 0.0
          %829 = vmatpush1.msra.mxu0 0.0
          %830 = vmatprep.subr.mxu0 0.0
          %831 = vmatpush1.msra.mxu0 0.0
          %832 = vmatprep.subr.mxu0 0.0
          %833 = vmatpush1.msra.mxu0 0.0
          %834 = vmatprep.subr.mxu0 0.0
          %835 = vmatpush1.msra.mxu0 0.0
          %836 = vmatprep.mubr.f32.mxu0 0.0
          %837 = vmatmul.mubr.f32.gmra.mrb[0].mxu0 %v770
          %v838 = vpop.f32.mrb[0].mxu0
          %v839 = vadd.f32 0.0, %v838
          %v840 = vpop.f32.mrb[0].mxu0
          %841 = vdwg.mxu0
          %v842 = vmax.f32 %v839, 0.0
          %v843 = vld [vmem:[#allocation16] sm:$0xff]
          %v844 = vld [vmem:[#allocation16 + $0x8] sm:$0xff]
          %v845 = vld [vmem:[#allocation16 + $0x10] sm:$0xff]
          %v846 = vld [vmem:[#allocation16 + $0x18] sm:$0xff]
          %v848 = vsel %vm533, %v843, 0
          %v851 = vsel %vm533, %v844, 0
          %v854 = vsel %vm533, %v845, 0
          %v857 = vsel %vm533, %v846, 0
          %859 = vmatprep.subr.mxu0 0.0
          %860 = vmatpush1.msra.mxu0 %v842
          %861 = vmatprep.subr.mxu0 0.0
          %862 = vmatpush1.msra.mxu0 0.0
          %863 = vmatprep.subr.mxu0 0.0
          %864 = vmatpush1.msra.mxu0 0.0
          %865 = vmatprep.subr.mxu0 0.0
          %866 = vmatpush1.msra.mxu0 0.0
          %867 = vmatprep.subr.mxu0 0.0
          %868 = vmatpush1.msra.mxu0 0.0
          %869 = vmatprep.subr.mxu0 0.0
          %870 = vmatpush1.msra.mxu0 0.0
          %871 = vmatprep.subr.mxu0 0.0
          %872 = vmatpush1.msra.mxu0 0.0
          %873 = vmatprep.subr.mxu0 0.0
          %874 = vmatpush1.msra.mxu0 0.0
          %875 = vmatprep.subr.mxu0 0.0
          %876 = vmatpush1.msra.mxu0 0.0
          %877 = vmatprep.subr.mxu0 0.0
          %878 = vmatpush1.msra.mxu0 0.0
          %879 = vmatprep.subr.mxu0 0.0
          %880 = vmatpush1.msra.mxu0 0.0
          %881 = vmatprep.subr.mxu0 0.0
          %882 = vmatpush1.msra.mxu0 0.0
          %883 = vmatprep.subr.mxu0 0.0
          %884 = vmatpush1.msra.mxu0 0.0
          %885 = vmatprep.subr.mxu0 0.0
          %886 = vmatpush1.msra.mxu0 0.0
          %887 = vmatprep.subr.mxu0 0.0
          %888 = vmatpush1.msra.mxu0 0.0
          %889 = vmatprep.subr.mxu0 0.0
          %890 = vmatpush1.msra.mxu0 0.0
          %891 = vmatprep.subr.mxu0 0.0
          %892 = vmatpush1.msra.mxu0 0.0
          %893 = vmatprep.subr.mxu0 0.0
          %894 = vmatpush1.msra.mxu0 0.0
          %895 = vmatprep.subr.mxu0 0.0
          %896 = vmatpush1.msra.mxu0 0.0
          %897 = vmatprep.subr.mxu0 0.0
          %898 = vmatpush1.msra.mxu0 0.0
          %899 = vmatprep.subr.mxu0 0.0
          %900 = vmatpush1.msra.mxu0 0.0
          %901 = vmatprep.subr.mxu0 0.0
          %902 = vmatpush1.msra.mxu0 0.0
          %903 = vmatprep.subr.mxu0 0.0
          %904 = vmatpush1.msra.mxu0 0.0
          %905 = vmatprep.subr.mxu0 0.0
          %906 = vmatpush1.msra.mxu0 0.0
          %907 = vmatprep.subr.mxu0 0.0
          %908 = vmatpush1.msra.mxu0 0.0
          %909 = vmatprep.subr.mxu0 0.0
          %910 = vmatpush1.msra.mxu0 0.0
          %911 = vmatprep.subr.mxu0 0.0
          %912 = vmatpush1.msra.mxu0 0.0
          %913 = vmatprep.subr.mxu0 0.0
          %914 = vmatpush1.msra.mxu0 0.0
          %915 = vmatprep.subr.mxu0 0.0
          %916 = vmatpush1.msra.mxu0 0.0
          %917 = vmatprep.subr.mxu0 0.0
          %918 = vmatpush1.msra.mxu0 0.0
          %919 = vmatprep.subr.mxu0 0.0
          %920 = vmatpush1.msra.mxu0 0.0
          %921 = vmatprep.subr.mxu0 0.0
          %922 = vmatpush1.msra.mxu0 0.0
          %923 = vmatprep.mubr.f32.mxu0 0.0
          %924 = vmatmul.mubr.f32.gmra.mrb[0].mxu0 %v848
          %v925 = vpop.f32.mrb[0].mxu0
          %v926 = vadd.f32 0.0, %v925
          %v927 = vpop.f32.mrb[0].mxu0
          %928 = vmatprep.mubr.f32.mxu0 0.0
          %929 = vmatmul.mubr.f32.gmra.mrb[0].mxu0 %v851
          %v930 = vpop.f32.mrb[0].mxu0
          %v931 = vadd.f32 0.0, %v930
          %v932 = vpop.f32.mrb[0].mxu0
          %933 = vmatprep.mubr.f32.mxu0 0.0
          %934 = vmatmul.mubr.f32.gmra.mrb[0].mxu0 %v854
          %v935 = vpop.f32.mrb[0].mxu0
          %v936 = vadd.f32 0.0, %v935
          %v937 = vpop.f32.mrb[0].mxu0
          %938 = vmatprep.mubr.f32.mxu0 0.0
          %939 = vmatmul.mubr.f32.gmra.mrb[0].mxu0 %v857
          %v940 = vpop.f32.mrb[0].mxu0
          %v941 = vadd.f32 0.0, %v940
          %v942 = vpop.f32.mrb[0].mxu0
          %943 = vdwg.mxu0
          %v944 = vxor.u32 %v926, 2147483648
          %v945 = vxor.u32 %v931, 2147483648
          %v946 = vxor.u32 %v936, 2147483648
          %v947 = vxor.u32 %v941, 2147483648
          %v948 = vmul.f32 %v944, 1.442695
          %v949 = vpow.pop %v948
          %v950 = vmul.f32 %v945, 1.442695
          %v951 = vpow.pop %v950
          %v952 = vmul.f32 %v946, 1.442695
          %v953 = vpow.pop %v952
          %v954 = vmul.f32 %v947, 1.442695
          %v955 = vpow.pop %v954
          %v956 = vadd.f32 %v949, 1.0
          %v957 = vadd.f32 %v951, 1.0
          %v958 = vadd.f32 %v953, 1.0
          %v959 = vadd.f32 %v955, 1.0
          %v960 = vrcp.pop %v956
          %v961 = vmul.f32 1.0, %v960
          %v962 = vrcp.pop %v957
          %v963 = vmul.f32 1.0, %v962
          %v964 = vrcp.pop %v958
          %v965 = vmul.f32 1.0, %v964
          %v966 = vrcp.pop %v959
          %v967 = vmul.f32 1.0, %v966
          %v968 = vld [vmem:[#allocation17] sm:$0xff]
          %v969 = vld [vmem:[#allocation17 + $0x8] sm:$0xff]
          %v970 = vld [vmem:[#allocation17 + $0x10] sm:$0xff]
          %v971 = vld [vmem:[#allocation17 + $0x18] sm:$0xff]
          %v972 = vmul.f32 %v961, %v968
          %v973 = vmul.f32 %v963, %v969
          %v974 = vmul.f32 %v965, %v970
          %v975 = vmul.f32 %v967, %v971
          %v976 = vld [vmem:[#allocation2] sm:$0xff]
          %v977 = vld [vmem:[#allocation2 + $0x8] sm:$0xff]
          %v978 = vld [vmem:[#allocation2 + $0x10] sm:$0xff]
          %v979 = vld [vmem:[#allocation2 + $0x18] sm:$0xff]
          %v980 = vld [vmem:[#allocation2 + $0x20] sm:$0xff]
          %v981 = vld [vmem:[#allocation2 + $0x28] sm:$0xff]
          %v982 = vld [vmem:[#allocation2 + $0x30] sm:$0xff]
          %v983 = vld [vmem:[#allocation2 + $0x38] sm:$0xff]
          %985 = vset.pattern.permute.xlu0 0
          %986 = vperm.xlu0 %985, %v972
          %v987 = vpop.permute.xlu0 %986
          %990 = vset.pattern.permute.xlu0 0
          %991 = vperm.xlu0 %990, %v973
          %v992 = vpop.permute.xlu0 %991
          %995 = vset.pattern.permute.xlu0 0
          %996 = vperm.xlu0 %995, %v974
          %v997 = vpop.permute.xlu0 %996
          %1000 = vset.pattern.permute.xlu0 0
          %1001 = vperm.xlu0 %1000, %v975
          %v1002 = vpop.permute.xlu0 %1001
          %v1004 = vmul.f32 %v976, %v987
          %v1005 = vmul.f32 %v977, %v987
          %v1006 = vmul.f32 %v978, %v992
          %v1007 = vmul.f32 %v979, %v992
          %v1008 = vmul.f32 %v980, %v997
          %v1009 = vmul.f32 %v981, %v997
          %v1010 = vmul.f32 %v982, %v1002
          %v1011 = vmul.f32 %v983, %v1002
          %v1012 = vadd.f32 %v1004, %v1006
          %v1013 = vadd.f32 %v1012, %v1008
          %v1014 = vadd.f32 %v1013, %v1010
          %v1015 = vrot.slane %v1014, 4
          %v1016 = vadd.f32 %v1014, %v1015
          %v1017 = vrot.slane %v1016, 2
          %v1018 = vadd.f32 %v1016, %v1017
          %v1019 = vrot.slane %v1018, 1
          %v1020 = vadd.f32 %v1018, %v1019
          %v1021 = vadd.f32 %v1005, %v1007
          %v1022 = vadd.f32 %v1021, %v1009
          %v1023 = vadd.f32 %v1022, %v1011
          %v1024 = vrot.slane %v1023, 4
          %v1025 = vadd.f32 %v1023, %v1024
          %v1026 = vrot.slane %v1025, 2
          %v1027 = vadd.f32 %v1025, %v1026
          %v1028 = vrot.slane %v1027, 1
          %v1029 = vadd.f32 %v1027, %v1028
          %v1030 = vld [vmem:[#allocation4] sm:$0x1]
          %1032 = vset.pattern.permute.xlu0 0
          %1033 = vperm.xlu0 %1032, %v1030
          %v1034 = vpop.permute.xlu0 %1033
          %v1036 = vlaneseq
          %v1037 = vshrl.u32 %v1036, 7
          %v1038 = vsub.s32 0, %v1037
          %v1039 = vrot.slane %v1034, %v1038
          %v1040 = vadd.f32 %v1020, %v1039
          %v1041 = vadd.f32 %v1029, %v1039
          %v1042 = vxor.u32 %v1040, 2147483648
          %v1043 = vxor.u32 %v1041, 2147483648
          %v1044 = vmul.f32 %v1042, 1.442695
          %v1045 = vpow.pop %v1044
          %v1046 = vmul.f32 %v1043, 1.442695
          %v1047 = vpow.pop %v1046
          %v1048 = vadd.f32 %v1045, 1.0
          %v1049 = vadd.f32 %v1047, 1.0
          %v1050 = vrcp.pop %v1048
          %v1051 = vmul.f32 1.0, %v1050
          %v1052 = vrcp.pop %v1049
          %v1053 = vmul.f32 1.0, %v1052
          %v1054 = vld [vmem:[%s493] sm:$0xff]
          %v1055 = vld [vmem:[%s493 + $0x8] sm:$0xff]
          %v1056 = vmul.f32 %v1054, %v1051
          %v1057 = vmul.f32 %v1055, %v1053
          %1058 = vst [vmem:[%s493] sm:$0xff] %v1056
          %1059 = vst [vmem:[%s493 + $0x8] sm:$0xff] %v1057
        $region96: #{attention_block_se.1} parent=55 // pred_fallthru
          _
        %s1060 = sand.u32 %s257, 1
        %s1061 = scalar_lea.sflag [#allocation7], %s1060
        %s1062 = sand.u32 %s257, 1
        %s1063 = smul.addr %s1062, 16
        %s1064 = scalar_lea.vmem [#allocation19], %s1063
        // Predicated region
        $region97: #{attention_block_se.1} parent=55 // pred_check
          %p1065 = pneg %p267
        $region98: #{attention_block_se.1} parent=55 // pred_check_branch
          %1067 = sbr.rel (%p1065) target = $region100
        $region99: #{attention_block_se.1} parent=55 // pred_region
          %s1069 = ssub.s32 256, 256
          %1070 = vsyncadd %s1061, %s1069
          %s1071 = smul.addr %s38, 2
          %s1072 = smul.addr %s1071, 128
          %s1073 = scalar_lea.hbm %s9, %s1072
          %s1075 = sshll.u32 %s1064, 4
          %s1076 = int_to_ptr.vmem [resolvable:$true] %s1075
          %1078 = dma.vmem_to_hbm [thread:$0]  %s1076, 256, %s1073, %s1061
        $region100: #{attention_block_se.1} parent=55 // pred_fallthru
          _
      $region56: #{attention_block_se.1} parent=5 // pred_fallthru
        _
      %p1079 = scmp.le.s32.totalorder 2, %s29
      // Predicated region
      $region101: #{attention_block_se.1} parent=5 // pred_check
        %p1080 = pneg %p1079
      $region102: #{attention_block_se.1} parent=5 // pred_check_branch
        %1082 = sbr.rel (%p1080) target = $region104
      $region103: #{attention_block_se.1} parent=5 // pred_region
        %s1083 = ssub.s32 %s29, 2
        // Predicated region
        $region105: #{attention_block_se.1} parent=103 // pred_check
          %p1084 = pneg %p273
        $region106: #{attention_block_se.1} parent=103 // pred_check_branch
          %1086 = sbr.rel (%p1084) target = $region108
        $region107: #{attention_block_se.1} parent=103 // pred_region
          %s1087 = sand.u32 %s258, 1
          %s1088 = scalar_lea.sflag [#allocation7], %s1087
          %s1089 = sand.u32 %s258, 1
          %s1090 = smul.addr %s1089, 16
          %s1091 = scalar_lea.vmem [#allocation19], %s1090
          %1092 = dma.done %s1088, 256
        $region108: #{attention_block_se.1} parent=103 // pred_fallthru
          _
      $region104: #{attention_block_se.1} parent=5 // pred_fallthru
        _
    $region6: #{attention_block_se.1} parent=1 // loop_footer
      %s33 = sadd.s32 1, %s29
    $region7: #{attention_block_se.1} parent=1 // loop_footer_branch
      %28 = sbr.rel target = $region3
    $region8: #{attention_block_se.1} parent=1 // loop_exit
      _
    %1093 = vsyncpa [#allocation6], 1
    %s1094 = scalar_lea.sflag [#allocation6], 1
    %1095 = vsyncpa %s1094, 1
    %1096 = vsyncpa [#allocation9], 1
    %s1097 = scalar_lea.sflag [#allocation9], 1
    %1098 = vsyncpa %s1097, 1
    %1099 = vsyncpa [#allocation12], 1
    %1100 = vsyncpa [#allocation15], 1
    %1101 = vsyncpa [#allocation18], 1
    %1102 = vsyncpa [#allocation7], 1
    %s1103 = scalar_lea.sflag [#allocation7], 1
    %1104 = vsyncpa %s1103, 1

</llo_original>
